<compile_context>
chip_gen: v7x
topology: tpu7x:2x2x1
jax: 0.10.0
libtpu: 0.0.40
codegen_flags: <defaults>
</compile_context>

<pallas_src>
import jax
import jax.numpy as jnp
from jax import lax
from jax.experimental import pallas as pl
from jax.experimental.pallas import tpu as pltpu

_LANES = 128          # batch elements per lane row
_SUB = 8              # sublanes per (8,128) compute chunk
_PAIR = 2 * _SUB      # two chunks processed per loop iteration (interleaved)
_SQRT_ITERS = 8       # fixed-point iterations for trace(sqrt(E)) (f32-exact)


def _field_invariants(g1_ref, g2_ref, sl):
    """3x3 Gaussian algebra for one (8,128) batch chunk.

    Returns (i1, i2, 2*sqrt(i3), loc_diff2, trace_sum): everything the
    trace(sqrt(E)) fixed point and the final distance need (5 live vregs).
    """
    def f1(f):  # field f of Gaussian 1 -> dense (8, 128) tile
        return g1_ref[f, sl, :]

    def f2(f):
        return g2_ref[f, sl, :]

    # ||loc1 - loc2||^2
    loc_diff2 = sum((f1(i) - f2(i)) ** 2 for i in range(3))

    s1 = [f1(3 + i) for i in range(3)]
    s2 = [f2(3 + i) for i in range(3)]
    r1 = [[f1(6 + 3 * i + j) for j in range(3)] for i in range(3)]
    r2 = [[f2(6 + 3 * i + j) for j in range(3)] for i in range(3)]
    sqrt_s1 = [jnp.sqrt(x) for x in s1]

    # cov2 = R2 @ diag(s2) @ R2^T   (symmetric -> 6 unique entries)
    cov2 = {}
    for i in range(3):
        for j in range(i, 3):
            cov2[(i, j)] = sum(r2[i][k] * s2[k] * r2[j][k] for k in range(3))

    def c2(i, j):
        return cov2[(i, j)] if i <= j else cov2[(j, i)]

    # T = cov2 @ R1 (full 3x3), then M = R1^T @ T (symmetric, 6 entries)
    T = [[sum(c2(a, b) * r1[b][j] for b in range(3)) for j in range(3)]
         for a in range(3)]
    M = {}
    for i in range(3):
        for j in range(i, 3):
            M[(i, j)] = sum(r1[a][i] * T[a][j] for a in range(3))

    # E = diag(sqrt(s1)) @ M @ diag(sqrt(s1)); symmetric by construction, so
    # the reference's (E + E^T)/2 is a no-op here.
    e00 = s1[0] * M[(0, 0)]
    e11 = s1[1] * M[(1, 1)]
    e22 = s1[2] * M[(2, 2)]
    e01 = sqrt_s1[0] * sqrt_s1[1] * M[(0, 1)]
    e02 = sqrt_s1[0] * sqrt_s1[2] * M[(0, 2)]
    e12 = sqrt_s1[1] * sqrt_s1[2] * M[(1, 2)]

    # Invariants of E (i1/i2 clamped: E is PSD up to roundoff).
    i1 = jnp.maximum(e00 + e11 + e22, 0.0)
    i2 = jnp.maximum(e00 * e11 - e01 * e01
                     + e00 * e22 - e02 * e02
                     + e11 * e22 - e12 * e12, 0.0)
    # det(E) = det(diag(s1)) * det(R1^T cov2 R1) = prod(s1) * prod(s2) because
    # |det R1| = |det R2| = 1: exact, no cancellation, no clamp needed.
    i3 = (s1[0] * s1[1] * s1[2]) * (s2[0] * s2[1] * s2[2])
    two_sqrt_i3 = 2.0 * jnp.sqrt(i3)

    trace_sum = (s1[0] + s1[1] + s1[2]) + (s2[0] + s2[1] + s2[2])
    return i1, i2, two_sqrt_i3, loc_diff2, trace_sum


def _wasserstein_kernel(g1_ref, g2_ref, out_ref):
    # g*_ref : (15, rows_blk, 128)  rows: 0-2 loc, 3-5 scale, 6-14 rot
    # out_ref: (rows_blk, 128)
    rows_blk = out_ref.shape[0]
    n_pairs = rows_blk // _PAIR

    def pair(c, carry):
        ra = pl.multiple_of(c * _PAIR, _PAIR)
        rb = pl.multiple_of(ra + _SUB, _SUB)
        sla = pl.ds(ra, _SUB)
        slb = pl.ds(rb, _SUB)

        # 3x3 algebra per chunk (keeps live vregs bounded), then the serial
        # EUP sqrt chains of the two chunks are interleaved so they hide each
        # other's latency.
        i1a, i2a, c3a, da, tra = _field_invariants(g1_ref, g2_ref, sla)
        i1b, i2b, c3b, db, trb = _field_invariants(g1_ref, g2_ref, slb)

        # trace(sqrt(E)) via  t^2 = I1 + 2u,  u^2 = I2 + 2*sqrt(I3)*t
        # (monotone fixed point from t0 = sqrt(I1), contraction <= 1/9).
        ta = jnp.sqrt(i1a)
        tb = jnp.sqrt(i1b)
        for _ in range(_SQRT_ITERS):
            ua = jnp.sqrt(i2a + c3a * ta)
            ub = jnp.sqrt(i2b + c3b * tb)
            ta = jnp.sqrt(i1a + 2.0 * ua)
            tb = jnp.sqrt(i1b + 2.0 * ub)

        out_ref[sla, :] = jnp.sqrt(da + jnp.maximum(tra - 2.0 * ta, 0.0))
        out_ref[slb, :] = jnp.sqrt(db + jnp.maximum(trb - 2.0 * tb, 0.0))
        return carry

    lax.fori_loop(0, n_pairs, pair, 0)


def _choose_blocking(rows, block_rows):
    """Pick (rows_blk, rows_pad): block multiple of _PAIR, >=2 grid steps when
    possible (v7x megacore), capped by block_rows (VMEM: 512 rows ~ 15.5 MiB
    double-buffered, safe on v5e/v6e 128 MiB and v7x 64 MiB VMEM)."""
    rows16 = pl.cdiv(max(rows, 1), _PAIR) * _PAIR
    if rows16 >= 2 * _PAIR:
        half = max(_PAIR, (rows16 // 2 // _PAIR) * _PAIR)
        rows_blk = max(_PAIR, (min(block_rows, half) // _PAIR) * _PAIR)
    else:
        rows_blk = _PAIR
    rows_pad = pl.cdiv(rows16, rows_blk) * rows_blk
    return rows_blk, rows_pad


def _run_packed(g1, g2, rows_blk, rows_pad):
    return pl.pallas_call(
        _wasserstein_kernel,
        out_shape=jax.ShapeDtypeStruct((rows_pad, _LANES), jnp.float32),
        grid=(rows_pad // rows_blk,),
        in_specs=[pl.BlockSpec((15, rows_blk, _LANES), lambda i: (0, i, 0)),
                  pl.BlockSpec((15, rows_blk, _LANES), lambda i: (0, i, 0))],
        out_specs=pl.BlockSpec((rows_blk, _LANES), lambda i: (i, 0)),
        compiler_params=pltpu.CompilerParams(
            dimension_semantics=("parallel",),   # splits blocks across v7x's 2 TCs
            vmem_limit_bytes=32 << 20),
    )(g1, g2)


def wasserstein_gaussian_packed(g1, g2, *, block_rows=512):
    """Zero-copy fast path for field-major producers.

    g1/g2: (15, rows, 128) f32 — rows 0-2 loc, 3-5 scale, 6-14 rot (row-major);
    batch element b lives at (r, l) = (b // 128, b % 128).  Returns (rows*128,).
    """
    assert g1.shape == g2.shape and g1.shape[0] == 15 and g1.shape[2] == _LANES
    rows = g1.shape[1]
    rows_blk, rows_pad = _choose_blocking(rows, block_rows)
    if rows_pad != rows:
        pad = ((0, 0), (0, rows_pad - rows), (0, 0))
        g1 = jnp.pad(g1, pad)
        g2 = jnp.pad(g2, pad)
    out = _run_packed(g1, g2, rows_blk, rows_pad)
    return out.reshape(rows_pad * _LANES)[: rows * _LANES]


def wasserstein_gaussian(loc1, scale1, rot_matrix1, loc2, scale2, rot_matrix2,
                         *, block_rows=512):
    """loc*: (B,3), scale*: (B,3), rot_matrix*: (B,3,3) -> (B,) distances."""
    B = loc1.shape[0]
    f32 = jnp.float32
    rows_blk, rows_pad = _choose_blocking(pl.cdiv(B, _LANES), block_rows)
    B_pad = rows_pad * _LANES

    # TODO(synk): best case is the producer emitting the field-major
    # (15, R, 128) layout directly (use wasserstein_gaussian_packed); this pack
    # is the one remaining extra HBM copy of the inputs, structured as a single
    # transpose+concat+pad fusion writing the padded packed array in one pass.
    def pack(loc, scale, rot):
        x = jnp.concatenate(
            [jnp.asarray(loc, f32).T,                        # (3, B)
             jnp.asarray(scale, f32).T,                      # (3, B)
             jnp.asarray(rot, f32).reshape(B, 9).T],         # (9, B)
            axis=0)                                          # (15, B)
        x = jnp.pad(x, ((0, 0), (0, B_pad - B)))             # (15, B_pad)
        return x.reshape(15, rows_pad, _LANES)

    out = _run_packed(pack(loc1, scale1, rot_matrix1),
                      pack(loc2, scale2, rot_matrix2),
                      rows_blk, rows_pad)
    return out.reshape(B_pad)[:B]


def _reference(loc1, scale1, rot1, loc2, scale2, rot2):
    # Pure-JAX transliteration of the PyTorch forward (uses eigvalsh).
    loc_diff2 = jnp.sum((loc1 - loc2) ** 2, axis=-1)
    cov1_sqrt_diag = jax.vmap(jnp.diag)(jnp.sqrt(scale1))
    cov2 = rot2 @ (jax.vmap(jnp.diag)(scale2) @ jnp.swapaxes(rot2, 1, 2))
    cov2_r1 = jnp.swapaxes(rot1, 1, 2) @ cov2 @ rot1
    E = cov1_sqrt_diag @ cov2_r1 @ cov1_sqrt_diag
    E = (E + jnp.swapaxes(E, 1, 2)) / 2
    eig = jnp.linalg.eigvalsh(E)
    e_sqrt_trace = jnp.sum(jnp.sqrt(jnp.sqrt(eig ** 2)), axis=-1)
    cov_w = jnp.clip(scale1.sum(-1) + scale2.sum(-1) - 2 * e_sqrt_trace, 0.0, None)
    return jnp.sqrt(loc_diff2 + cov_w)


if __name__ == "__main__":
    key = jax.random.PRNGKey(0)
    ks = jax.random.split(key, 6)
    B = 8

    loc1 = jax.random.normal(ks[0], (B, 3), jnp.float32)
    loc2 = jax.random.normal(ks[1], (B, 3), jnp.float32)
    scale1 = jax.random.uniform(ks[2], (B, 3), jnp.float32, minval=0.5, maxval=2.0)
    scale2 = jax.random.uniform(ks[3], (B, 3), jnp.float32, minval=0.5, maxval=2.0)
    rot1, _ = jnp.linalg.qr(jax.random.normal(ks[4], (B, 3, 3), jnp.float32))
    rot2, _ = jnp.linalg.qr(jax.random.normal(ks[5], (B, 3, 3), jnp.float32))

    out = wasserstein_gaussian(loc1, scale1, rot1, loc2, scale2, rot2)
    out = jax.block_until_ready(out)

    ref = _reference(loc1, scale1, rot1, loc2, scale2, rot2)
    assert out.shape == (B,)
    assert jnp.allclose(out, ref, rtol=1e-3, atol=1e-3), (out, ref)
    print("KERNEL_OK")
</pallas_src>

<mosaic_0001>
module attributes {stable_mosaic.version = 11 : i64} {
  func.func @_wasserstein_kernel(%arg0: i32, %arg1: memref<15x16x128xf32, #tpu.memory_space<vmem>>, %arg2: memref<15x16x128xf32, #tpu.memory_space<vmem>>, %arg3: memref<16x128xf32, #tpu.memory_space<vmem>>) attributes {dimension_semantics = [#tpu.dimension_semantics<parallel>], iteration_bounds = array<i64: 1>, scalar_prefetch = 0 : i64, scratch_operands = 0 : i64, tpu.core_type = #tpu.core_type<tc>, window_params = [{transform_indices = @transform_0, window_bounds = array<i64: 15, 16, 128>}, {transform_indices = @transform_1, window_bounds = array<i64: 15, 16, 128>}, {transform_indices = @transform_2, window_bounds = array<i64: 16, 128>}]} {
    %c0_i32 = arith.constant 0 : i32
    %c16_i32 = arith.constant 16 : i32
    %0 = arith.muli %c0_i32, %c16_i32 : i32
    %1 = tpu.assume_multiple %0, 16 : i32
    %c8_i32 = arith.constant 8 : i32
    %2 = arith.addi %1, %c8_i32 : i32
    %3 = tpu.assume_multiple %2, 8 : i32
    %c0 = arith.constant 0 : index
    %4 = arith.index_cast %1 : i32 to index
    %c0_0 = arith.constant 0 : index
    %5 = vector.load %arg1[%c0, %4, %c0_0] : memref<15x16x128xf32, #tpu.memory_space<vmem>>, vector<1x8x128xf32>
    %6 = vector.shape_cast %5 : vector<1x8x128xf32> to vector<8x128xf32>
    %c0_1 = arith.constant 0 : index
    %7 = arith.index_cast %1 : i32 to index
    %c0_2 = arith.constant 0 : index
    %8 = vector.load %arg2[%c0_1, %7, %c0_2] : memref<15x16x128xf32, #tpu.memory_space<vmem>>, vector<1x8x128xf32>
    %9 = vector.shape_cast %8 : vector<1x8x128xf32> to vector<8x128xf32>
    %10 = arith.subf %6, %9 : vector<8x128xf32>
    %11 = arith.mulf %10, %10 : vector<8x128xf32>
    %cst = arith.constant 0.000000e+00 : f32
    %12 = vector.broadcast %cst : f32 to vector<8x128xf32>
    %13 = arith.addf %12, %11 : vector<8x128xf32>
    %c1 = arith.constant 1 : index
    %14 = arith.index_cast %1 : i32 to index
    %c0_3 = arith.constant 0 : index
    %15 = vector.load %arg1[%c1, %14, %c0_3] : memref<15x16x128xf32, #tpu.memory_space<vmem>>, vector<1x8x128xf32>
    %16 = vector.shape_cast %15 : vector<1x8x128xf32> to vector<8x128xf32>
    %c1_4 = arith.constant 1 : index
    %17 = arith.index_cast %1 : i32 to index
    %c0_5 = arith.constant 0 : index
    %18 = vector.load %arg2[%c1_4, %17, %c0_5] : memref<15x16x128xf32, #tpu.memory_space<vmem>>, vector<1x8x128xf32>
    %19 = vector.shape_cast %18 : vector<1x8x128xf32> to vector<8x128xf32>
    %20 = arith.subf %16, %19 : vector<8x128xf32>
    %21 = arith.mulf %20, %20 : vector<8x128xf32>
    %22 = arith.addf %13, %21 : vector<8x128xf32>
    %c2 = arith.constant 2 : index
    %23 = arith.index_cast %1 : i32 to index
    %c0_6 = arith.constant 0 : index
    %24 = vector.load %arg1[%c2, %23, %c0_6] : memref<15x16x128xf32, #tpu.memory_space<vmem>>, vector<1x8x128xf32>
    %25 = vector.shape_cast %24 : vector<1x8x128xf32> to vector<8x128xf32>
    %c2_7 = arith.constant 2 : index
    %26 = arith.index_cast %1 : i32 to index
    %c0_8 = arith.constant 0 : index
    %27 = vector.load %arg2[%c2_7, %26, %c0_8] : memref<15x16x128xf32, #tpu.memory_space<vmem>>, vector<1x8x128xf32>
    %28 = vector.shape_cast %27 : vector<1x8x128xf32> to vector<8x128xf32>
    %29 = arith.subf %25, %28 : vector<8x128xf32>
    %30 = arith.mulf %29, %29 : vector<8x128xf32>
    %31 = arith.addf %22, %30 : vector<8x128xf32>
    %c3 = arith.constant 3 : index
    %32 = arith.index_cast %1 : i32 to index
    %c0_9 = arith.constant 0 : index
    %33 = vector.load %arg1[%c3, %32, %c0_9] : memref<15x16x128xf32, #tpu.memory_space<vmem>>, vector<1x8x128xf32>
    %34 = vector.shape_cast %33 : vector<1x8x128xf32> to vector<8x128xf32>
    %c4 = arith.constant 4 : index
    %35 = arith.index_cast %1 : i32 to index
    %c0_10 = arith.constant 0 : index
    %36 = vector.load %arg1[%c4, %35, %c0_10] : memref<15x16x128xf32, #tpu.memory_space<vmem>>, vector<1x8x128xf32>
    %37 = vector.shape_cast %36 : vector<1x8x128xf32> to vector<8x128xf32>
    %c5 = arith.constant 5 : index
    %38 = arith.index_cast %1 : i32 to index
    %c0_11 = arith.constant 0 : index
    %39 = vector.load %arg1[%c5, %38, %c0_11] : memref<15x16x128xf32, #tpu.memory_space<vmem>>, vector<1x8x128xf32>
    %40 = vector.shape_cast %39 : vector<1x8x128xf32> to vector<8x128xf32>
    %c3_12 = arith.constant 3 : index
    %41 = arith.index_cast %1 : i32 to index
    %c0_13 = arith.constant 0 : index
    %42 = vector.load %arg2[%c3_12, %41, %c0_13] : memref<15x16x128xf32, #tpu.memory_space<vmem>>, vector<1x8x128xf32>
    %43 = vector.shape_cast %42 : vector<1x8x128xf32> to vector<8x128xf32>
    %c4_14 = arith.constant 4 : index
    %44 = arith.index_cast %1 : i32 to index
    %c0_15 = arith.constant 0 : index
    %45 = vector.load %arg2[%c4_14, %44, %c0_15] : memref<15x16x128xf32, #tpu.memory_space<vmem>>, vector<1x8x128xf32>
    %46 = vector.shape_cast %45 : vector<1x8x128xf32> to vector<8x128xf32>
    %c5_16 = arith.constant 5 : index
    %47 = arith.index_cast %1 : i32 to index
    %c0_17 = arith.constant 0 : index
    %48 = vector.load %arg2[%c5_16, %47, %c0_17] : memref<15x16x128xf32, #tpu.memory_space<vmem>>, vector<1x8x128xf32>
    %49 = vector.shape_cast %48 : vector<1x8x128xf32> to vector<8x128xf32>
    %c6 = arith.constant 6 : index
    %50 = arith.index_cast %1 : i32 to index
    %c0_18 = arith.constant 0 : index
    %51 = vector.load %arg1[%c6, %50, %c0_18] : memref<15x16x128xf32, #tpu.memory_space<vmem>>, vector<1x8x128xf32>
    %52 = vector.shape_cast %51 : vector<1x8x128xf32> to vector<8x128xf32>
    %c7 = arith.constant 7 : index
    %53 = arith.index_cast %1 : i32 to index
    %c0_19 = arith.constant 0 : index
    %54 = vector.load %arg1[%c7, %53, %c0_19] : memref<15x16x128xf32, #tpu.memory_space<vmem>>, vector<1x8x128xf32>
    %55 = vector.shape_cast %54 : vector<1x8x128xf32> to vector<8x128xf32>
    %c8 = arith.constant 8 : index
    %56 = arith.index_cast %1 : i32 to index
    %c0_20 = arith.constant 0 : index
    %57 = vector.load %arg1[%c8, %56, %c0_20] : memref<15x16x128xf32, #tpu.memory_space<vmem>>, vector<1x8x128xf32>
    %58 = vector.shape_cast %57 : vector<1x8x128xf32> to vector<8x128xf32>
    %c9 = arith.constant 9 : index
    %59 = arith.index_cast %1 : i32 to index
    %c0_21 = arith.constant 0 : index
    %60 = vector.load %arg1[%c9, %59, %c0_21] : memref<15x16x128xf32, #tpu.memory_space<vmem>>, vector<1x8x128xf32>
    %61 = vector.shape_cast %60 : vector<1x8x128xf32> to vector<8x128xf32>
    %c10 = arith.constant 10 : index
    %62 = arith.index_cast %1 : i32 to index
    %c0_22 = arith.constant 0 : index
    %63 = vector.load %arg1[%c10, %62, %c0_22] : memref<15x16x128xf32, #tpu.memory_space<vmem>>, vector<1x8x128xf32>
    %64 = vector.shape_cast %63 : vector<1x8x128xf32> to vector<8x128xf32>
    %c11 = arith.constant 11 : index
    %65 = arith.index_cast %1 : i32 to index
    %c0_23 = arith.constant 0 : index
    %66 = vector.load %arg1[%c11, %65, %c0_23] : memref<15x16x128xf32, #tpu.memory_space<vmem>>, vector<1x8x128xf32>
    %67 = vector.shape_cast %66 : vector<1x8x128xf32> to vector<8x128xf32>
    %c12 = arith.constant 12 : index
    %68 = arith.index_cast %1 : i32 to index
    %c0_24 = arith.constant 0 : index
    %69 = vector.load %arg1[%c12, %68, %c0_24] : memref<15x16x128xf32, #tpu.memory_space<vmem>>, vector<1x8x128xf32>
    %70 = vector.shape_cast %69 : vector<1x8x128xf32> to vector<8x128xf32>
    %c13 = arith.constant 13 : index
    %71 = arith.index_cast %1 : i32 to index
    %c0_25 = arith.constant 0 : index
    %72 = vector.load %arg1[%c13, %71, %c0_25] : memref<15x16x128xf32, #tpu.memory_space<vmem>>, vector<1x8x128xf32>
    %73 = vector.shape_cast %72 : vector<1x8x128xf32> to vector<8x128xf32>
    %c14 = arith.constant 14 : index
    %74 = arith.index_cast %1 : i32 to index
    %c0_26 = arith.constant 0 : index
    %75 = vector.load %arg1[%c14, %74, %c0_26] : memref<15x16x128xf32, #tpu.memory_space<vmem>>, vector<1x8x128xf32>
    %76 = vector.shape_cast %75 : vector<1x8x128xf32> to vector<8x128xf32>
    %c6_27 = arith.constant 6 : index
    %77 = arith.index_cast %1 : i32 to index
    %c0_28 = arith.constant 0 : index
    %78 = vector.load %arg2[%c6_27, %77, %c0_28] : memref<15x16x128xf32, #tpu.memory_space<vmem>>, vector<1x8x128xf32>
    %79 = vector.shape_cast %78 : vector<1x8x128xf32> to vector<8x128xf32>
    %c7_29 = arith.constant 7 : index
    %80 = arith.index_cast %1 : i32 to index
    %c0_30 = arith.constant 0 : index
    %81 = vector.load %arg2[%c7_29, %80, %c0_30] : memref<15x16x128xf32, #tpu.memory_space<vmem>>, vector<1x8x128xf32>
    %82 = vector.shape_cast %81 : vector<1x8x128xf32> to vector<8x128xf32>
    %c8_31 = arith.constant 8 : index
    %83 = arith.index_cast %1 : i32 to index
    %c0_32 = arith.constant 0 : index
    %84 = vector.load %arg2[%c8_31, %83, %c0_32] : memref<15x16x128xf32, #tpu.memory_space<vmem>>, vector<1x8x128xf32>
    %85 = vector.shape_cast %84 : vector<1x8x128xf32> to vector<8x128xf32>
    %c9_33 = arith.constant 9 : index
    %86 = arith.index_cast %1 : i32 to index
    %c0_34 = arith.constant 0 : index
    %87 = vector.load %arg2[%c9_33, %86, %c0_34] : memref<15x16x128xf32, #tpu.memory_space<vmem>>, vector<1x8x128xf32>
    %88 = vector.shape_cast %87 : vector<1x8x128xf32> to vector<8x128xf32>
    %c10_35 = arith.constant 10 : index
    %89 = arith.index_cast %1 : i32 to index
    %c0_36 = arith.constant 0 : index
    %90 = vector.load %arg2[%c10_35, %89, %c0_36] : memref<15x16x128xf32, #tpu.memory_space<vmem>>, vector<1x8x128xf32>
    %91 = vector.shape_cast %90 : vector<1x8x128xf32> to vector<8x128xf32>
    %c11_37 = arith.constant 11 : index
    %92 = arith.index_cast %1 : i32 to index
    %c0_38 = arith.constant 0 : index
    %93 = vector.load %arg2[%c11_37, %92, %c0_38] : memref<15x16x128xf32, #tpu.memory_space<vmem>>, vector<1x8x128xf32>
    %94 = vector.shape_cast %93 : vector<1x8x128xf32> to vector<8x128xf32>
    %c12_39 = arith.constant 12 : index
    %95 = arith.index_cast %1 : i32 to index
    %c0_40 = arith.constant 0 : index
    %96 = vector.load %arg2[%c12_39, %95, %c0_40] : memref<15x16x128xf32, #tpu.memory_space<vmem>>, vector<1x8x128xf32>
    %97 = vector.shape_cast %96 : vector<1x8x128xf32> to vector<8x128xf32>
    %c13_41 = arith.constant 13 : index
    %98 = arith.index_cast %1 : i32 to index
    %c0_42 = arith.constant 0 : index
    %99 = vector.load %arg2[%c13_41, %98, %c0_42] : memref<15x16x128xf32, #tpu.memory_space<vmem>>, vector<1x8x128xf32>
    %100 = vector.shape_cast %99 : vector<1x8x128xf32> to vector<8x128xf32>
    %c14_43 = arith.constant 14 : index
    %101 = arith.index_cast %1 : i32 to index
    %c0_44 = arith.constant 0 : index
    %102 = vector.load %arg2[%c14_43, %101, %c0_44] : memref<15x16x128xf32, #tpu.memory_space<vmem>>, vector<1x8x128xf32>
    %103 = vector.shape_cast %102 : vector<1x8x128xf32> to vector<8x128xf32>
    %104 = math.sqrt %34 : vector<8x128xf32>
    %105 = math.sqrt %37 : vector<8x128xf32>
    %106 = math.sqrt %40 : vector<8x128xf32>
    %107 = arith.mulf %79, %43 : vector<8x128xf32>
    %108 = arith.mulf %107, %79 : vector<8x128xf32>
    %cst_45 = arith.constant 0.000000e+00 : f32
    %109 = vector.broadcast %cst_45 : f32 to vector<8x128xf32>
    %110 = arith.addf %109, %108 : vector<8x128xf32>
    %111 = arith.mulf %82, %46 : vector<8x128xf32>
    %112 = arith.mulf %111, %82 : vector<8x128xf32>
    %113 = arith.addf %110, %112 : vector<8x128xf32>
    %114 = arith.mulf %85, %49 : vector<8x128xf32>
    %115 = arith.mulf %114, %85 : vector<8x128xf32>
    %116 = arith.addf %113, %115 : vector<8x128xf32>
    %117 = arith.mulf %79, %43 : vector<8x128xf32>
    %118 = arith.mulf %117, %88 : vector<8x128xf32>
    %cst_46 = arith.constant 0.000000e+00 : f32
    %119 = vector.broadcast %cst_46 : f32 to vector<8x128xf32>
    %120 = arith.addf %119, %118 : vector<8x128xf32>
    %121 = arith.mulf %82, %46 : vector<8x128xf32>
    %122 = arith.mulf %121, %91 : vector<8x128xf32>
    %123 = arith.addf %120, %122 : vector<8x128xf32>
    %124 = arith.mulf %85, %49 : vector<8x128xf32>
    %125 = arith.mulf %124, %94 : vector<8x128xf32>
    %126 = arith.addf %123, %125 : vector<8x128xf32>
    %127 = arith.mulf %79, %43 : vector<8x128xf32>
    %128 = arith.mulf %127, %97 : vector<8x128xf32>
    %cst_47 = arith.constant 0.000000e+00 : f32
    %129 = vector.broadcast %cst_47 : f32 to vector<8x128xf32>
    %130 = arith.addf %129, %128 : vector<8x128xf32>
    %131 = arith.mulf %82, %46 : vector<8x128xf32>
    %132 = arith.mulf %131, %100 : vector<8x128xf32>
    %133 = arith.addf %130, %132 : vector<8x128xf32>
    %134 = arith.mulf %85, %49 : vector<8x128xf32>
    %135 = arith.mulf %134, %103 : vector<8x128xf32>
    %136 = arith.addf %133, %135 : vector<8x128xf32>
    %137 = arith.mulf %88, %43 : vector<8x128xf32>
    %138 = arith.mulf %137, %88 : vector<8x128xf32>
    %cst_48 = arith.constant 0.000000e+00 : f32
    %139 = vector.broadcast %cst_48 : f32 to vector<8x128xf32>
    %140 = arith.addf %139, %138 : vector<8x128xf32>
    %141 = arith.mulf %91, %46 : vector<8x128xf32>
    %142 = arith.mulf %141, %91 : vector<8x128xf32>
    %143 = arith.addf %140, %142 : vector<8x128xf32>
    %144 = arith.mulf %94, %49 : vector<8x128xf32>
    %145 = arith.mulf %144, %94 : vector<8x128xf32>
    %146 = arith.addf %143, %145 : vector<8x128xf32>
    %147 = arith.mulf %88, %43 : vector<8x128xf32>
    %148 = arith.mulf %147, %97 : vector<8x128xf32>
    %cst_49 = arith.constant 0.000000e+00 : f32
    %149 = vector.broadcast %cst_49 : f32 to vector<8x128xf32>
    %150 = arith.addf %149, %148 : vector<8x128xf32>
    %151 = arith.mulf %91, %46 : vector<8x128xf32>
    %152 = arith.mulf %151, %100 : vector<8x128xf32>
    %153 = arith.addf %150, %152 : vector<8x128xf32>
    %154 = arith.mulf %94, %49 : vector<8x128xf32>
    %155 = arith.mulf %154, %103 : vector<8x128xf32>
    %156 = arith.addf %153, %155 : vector<8x128xf32>
    %157 = arith.mulf %97, %43 : vector<8x128xf32>
    %158 = arith.mulf %157, %97 : vector<8x128xf32>
    %cst_50 = arith.constant 0.000000e+00 : f32
    %159 = vector.broadcast %cst_50 : f32 to vector<8x128xf32>
    %160 = arith.addf %159, %158 : vector<8x128xf32>
    %161 = arith.mulf %100, %46 : vector<8x128xf32>
    %162 = arith.mulf %161, %100 : vector<8x128xf32>
    %163 = arith.addf %160, %162 : vector<8x128xf32>
    %164 = arith.mulf %103, %49 : vector<8x128xf32>
    %165 = arith.mulf %164, %103 : vector<8x128xf32>
    %166 = arith.addf %163, %165 : vector<8x128xf32>
    %167 = arith.mulf %116, %52 : vector<8x128xf32>
    %cst_51 = arith.constant 0.000000e+00 : f32
    %168 = vector.broadcast %cst_51 : f32 to vector<8x128xf32>
    %169 = arith.addf %168, %167 : vector<8x128xf32>
    %170 = arith.mulf %126, %61 : vector<8x128xf32>
    %171 = arith.addf %169, %170 : vector<8x128xf32>
    %172 = arith.mulf %136, %70 : vector<8x128xf32>
    %173 = arith.addf %171, %172 : vector<8x128xf32>
    %174 = arith.mulf %116, %55 : vector<8x128xf32>
    %cst_52 = arith.constant 0.000000e+00 : f32
    %175 = vector.broadcast %cst_52 : f32 to vector<8x128xf32>
    %176 = arith.addf %175, %174 : vector<8x128xf32>
    %177 = arith.mulf %126, %64 : vector<8x128xf32>
    %178 = arith.addf %176, %177 : vector<8x128xf32>
    %179 = arith.mulf %136, %73 : vector<8x128xf32>
    %180 = arith.addf %178, %179 : vector<8x128xf32>
    %181 = arith.mulf %116, %58 : vector<8x128xf32>
    %cst_53 = arith.constant 0.000000e+00 : f32
    %182 = vector.broadcast %cst_53 : f32 to vector<8x128xf32>
    %183 = arith.addf %182, %181 : vector<8x128xf32>
    %184 = arith.mulf %126, %67 : vector<8x128xf32>
    %185 = arith.addf %183, %184 : vector<8x128xf32>
    %186 = arith.mulf %136, %76 : vector<8x128xf32>
    %187 = arith.addf %185, %186 : vector<8x128xf32>
    %188 = arith.mulf %126, %52 : vector<8x128xf32>
    %cst_54 = arith.constant 0.000000e+00 : f32
    %189 = vector.broadcast %cst_54 : f32 to vector<8x128xf32>
    %190 = arith.addf %189, %188 : vector<8x128xf32>
    %191 = arith.mulf %146, %61 : vector<8x128xf32>
    %192 = arith.addf %190, %191 : vector<8x128xf32>
    %193 = arith.mulf %156, %70 : vector<8x128xf32>
    %194 = arith.addf %192, %193 : vector<8x128xf32>
    %195 = arith.mulf %126, %55 : vector<8x128xf32>
    %cst_55 = arith.constant 0.000000e+00 : f32
    %196 = vector.broadcast %cst_55 : f32 to vector<8x128xf32>
    %197 = arith.addf %196, %195 : vector<8x128xf32>
    %198 = arith.mulf %146, %64 : vector<8x128xf32>
    %199 = arith.addf %197, %198 : vector<8x128xf32>
    %200 = arith.mulf %156, %73 : vector<8x128xf32>
    %201 = arith.addf %199, %200 : vector<8x128xf32>
    %202 = arith.mulf %126, %58 : vector<8x128xf32>
    %cst_56 = arith.constant 0.000000e+00 : f32
    %203 = vector.broadcast %cst_56 : f32 to vector<8x128xf32>
    %204 = arith.addf %203, %202 : vector<8x128xf32>
    %205 = arith.mulf %146, %67 : vector<8x128xf32>
    %206 = arith.addf %204, %205 : vector<8x128xf32>
    %207 = arith.mulf %156, %76 : vector<8x128xf32>
    %208 = arith.addf %206, %207 : vector<8x128xf32>
    %209 = arith.mulf %136, %52 : vector<8x128xf32>
    %cst_57 = arith.constant 0.000000e+00 : f32
    %210 = vector.broadcast %cst_57 : f32 to vector<8x128xf32>
    %211 = arith.addf %210, %209 : vector<8x128xf32>
    %212 = arith.mulf %156, %61 : vector<8x128xf32>
    %213 = arith.addf %211, %212 : vector<8x128xf32>
    %214 = arith.mulf %166, %70 : vector<8x128xf32>
    %215 = arith.addf %213, %214 : vector<8x128xf32>
    %216 = arith.mulf %136, %55 : vector<8x128xf32>
    %cst_58 = arith.constant 0.000000e+00 : f32
    %217 = vector.broadcast %cst_58 : f32 to vector<8x128xf32>
    %218 = arith.addf %217, %216 : vector<8x128xf32>
    %219 = arith.mulf %156, %64 : vector<8x128xf32>
    %220 = arith.addf %218, %219 : vector<8x128xf32>
    %221 = arith.mulf %166, %73 : vector<8x128xf32>
    %222 = arith.addf %220, %221 : vector<8x128xf32>
    %223 = arith.mulf %136, %58 : vector<8x128xf32>
    %cst_59 = arith.constant 0.000000e+00 : f32
    %224 = vector.broadcast %cst_59 : f32 to vector<8x128xf32>
    %225 = arith.addf %224, %223 : vector<8x128xf32>
    %226 = arith.mulf %156, %67 : vector<8x128xf32>
    %227 = arith.addf %225, %226 : vector<8x128xf32>
    %228 = arith.mulf %166, %76 : vector<8x128xf32>
    %229 = arith.addf %227, %228 : vector<8x128xf32>
    %230 = arith.mulf %52, %173 : vector<8x128xf32>
    %cst_60 = arith.constant 0.000000e+00 : f32
    %231 = vector.broadcast %cst_60 : f32 to vector<8x128xf32>
    %232 = arith.addf %231, %230 : vector<8x128xf32>
    %233 = arith.mulf %61, %194 : vector<8x128xf32>
    %234 = arith.addf %232, %233 : vector<8x128xf32>
    %235 = arith.mulf %70, %215 : vector<8x128xf32>
    %236 = arith.addf %234, %235 : vector<8x128xf32>
    %237 = arith.mulf %52, %180 : vector<8x128xf32>
    %cst_61 = arith.constant 0.000000e+00 : f32
    %238 = vector.broadcast %cst_61 : f32 to vector<8x128xf32>
    %239 = arith.addf %238, %237 : vector<8x128xf32>
    %240 = arith.mulf %61, %201 : vector<8x128xf32>
    %241 = arith.addf %239, %240 : vector<8x128xf32>
    %242 = arith.mulf %70, %222 : vector<8x128xf32>
    %243 = arith.addf %241, %242 : vector<8x128xf32>
    %244 = arith.mulf %52, %187 : vector<8x128xf32>
    %cst_62 = arith.constant 0.000000e+00 : f32
    %245 = vector.broadcast %cst_62 : f32 to vector<8x128xf32>
    %246 = arith.addf %245, %244 : vector<8x128xf32>
    %247 = arith.mulf %61, %208 : vector<8x128xf32>
    %248 = arith.addf %246, %247 : vector<8x128xf32>
    %249 = arith.mulf %70, %229 : vector<8x128xf32>
    %250 = arith.addf %248, %249 : vector<8x128xf32>
    %251 = arith.mulf %55, %180 : vector<8x128xf32>
    %cst_63 = arith.constant 0.000000e+00 : f32
    %252 = vector.broadcast %cst_63 : f32 to vector<8x128xf32>
    %253 = arith.addf %252, %251 : vector<8x128xf32>
    %254 = arith.mulf %64, %201 : vector<8x128xf32>
    %255 = arith.addf %253, %254 : vector<8x128xf32>
    %256 = arith.mulf %73, %222 : vector<8x128xf32>
    %257 = arith.addf %255, %256 : vector<8x128xf32>
    %258 = arith.mulf %55, %187 : vector<8x128xf32>
    %cst_64 = arith.constant 0.000000e+00 : f32
    %259 = vector.broadcast %cst_64 : f32 to vector<8x128xf32>
    %260 = arith.addf %259, %258 : vector<8x128xf32>
    %261 = arith.mulf %64, %208 : vector<8x128xf32>
    %262 = arith.addf %260, %261 : vector<8x128xf32>
    %263 = arith.mulf %73, %229 : vector<8x128xf32>
    %264 = arith.addf %262, %263 : vector<8x128xf32>
    %265 = arith.mulf %58, %187 : vector<8x128xf32>
    %cst_65 = arith.constant 0.000000e+00 : f32
    %266 = vector.broadcast %cst_65 : f32 to vector<8x128xf32>
    %267 = arith.addf %266, %265 : vector<8x128xf32>
    %268 = arith.mulf %67, %208 : vector<8x128xf32>
    %269 = arith.addf %267, %268 : vector<8x128xf32>
    %270 = arith.mulf %76, %229 : vector<8x128xf32>
    %271 = arith.addf %269, %270 : vector<8x128xf32>
    %272 = arith.mulf %34, %236 : vector<8x128xf32>
    %273 = arith.mulf %37, %257 : vector<8x128xf32>
    %274 = arith.mulf %40, %271 : vector<8x128xf32>
    %275 = arith.mulf %104, %105 : vector<8x128xf32>
    %276 = arith.mulf %275, %243 : vector<8x128xf32>
    %277 = arith.mulf %104, %106 : vector<8x128xf32>
    %278 = arith.mulf %277, %250 : vector<8x128xf32>
    %279 = arith.mulf %105, %106 : vector<8x128xf32>
    %280 = arith.mulf %279, %264 : vector<8x128xf32>
    %281 = arith.addf %272, %273 : vector<8x128xf32>
    %282 = arith.addf %281, %274 : vector<8x128xf32>
    %cst_66 = arith.constant 0.000000e+00 : f32
    %283 = vector.broadcast %cst_66 : f32 to vector<8x128xf32>
    %284 = arith.maximumf %282, %283 : vector<8x128xf32>
    %285 = arith.mulf %272, %273 : vector<8x128xf32>
    %286 = arith.mulf %276, %276 : vector<8x128xf32>
    %287 = arith.subf %285, %286 : vector<8x128xf32>
    %288 = arith.mulf %272, %274 : vector<8x128xf32>
    %289 = arith.addf %287, %288 : vector<8x128xf32>
    %290 = arith.mulf %278, %278 : vector<8x128xf32>
    %291 = arith.subf %289, %290 : vector<8x128xf32>
    %292 = arith.mulf %273, %274 : vector<8x128xf32>
    %293 = arith.addf %291, %292 : vector<8x128xf32>
    %294 = arith.mulf %280, %280 : vector<8x128xf32>
    %295 = arith.subf %293, %294 : vector<8x128xf32>
    %cst_67 = arith.constant 0.000000e+00 : f32
    %296 = vector.broadcast %cst_67 : f32 to vector<8x128xf32>
    %297 = arith.maximumf %295, %296 : vector<8x128xf32>
    %298 = arith.mulf %34, %37 : vector<8x128xf32>
    %299 = arith.mulf %298, %40 : vector<8x128xf32>
    %300 = arith.mulf %43, %46 : vector<8x128xf32>
    %301 = arith.mulf %300, %49 : vector<8x128xf32>
    %302 = arith.mulf %299, %301 : vector<8x128xf32>
    %303 = math.sqrt %302 : vector<8x128xf32>
    %cst_68 = arith.constant 2.000000e+00 : f32
    %304 = vector.broadcast %cst_68 : f32 to vector<8x128xf32>
    %305 = arith.mulf %304, %303 : vector<8x128xf32>
    %306 = arith.addf %34, %37 : vector<8x128xf32>
    %307 = arith.addf %306, %40 : vector<8x128xf32>
    %308 = arith.addf %43, %46 : vector<8x128xf32>
    %309 = arith.addf %308, %49 : vector<8x128xf32>
    %310 = arith.addf %307, %309 : vector<8x128xf32>
    %c0_69 = arith.constant 0 : index
    %311 = arith.index_cast %3 : i32 to index
    %c0_70 = arith.constant 0 : index
    %312 = vector.load %arg1[%c0_69, %311, %c0_70] : memref<15x16x128xf32, #tpu.memory_space<vmem>>, vector<1x8x128xf32>
    %313 = vector.shape_cast %312 : vector<1x8x128xf32> to vector<8x128xf32>
    %c0_71 = arith.constant 0 : index
    %314 = arith.index_cast %3 : i32 to index
    %c0_72 = arith.constant 0 : index
    %315 = vector.load %arg2[%c0_71, %314, %c0_72] : memref<15x16x128xf32, #tpu.memory_space<vmem>>, vector<1x8x128xf32>
    %316 = vector.shape_cast %315 : vector<1x8x128xf32> to vector<8x128xf32>
    %317 = arith.subf %313, %316 : vector<8x128xf32>
    %318 = arith.mulf %317, %317 : vector<8x128xf32>
    %cst_73 = arith.constant 0.000000e+00 : f32
    %319 = vector.broadcast %cst_73 : f32 to vector<8x128xf32>
    %320 = arith.addf %319, %318 : vector<8x128xf32>
    %c1_74 = arith.constant 1 : index
    %321 = arith.index_cast %3 : i32 to index
    %c0_75 = arith.constant 0 : index
    %322 = vector.load %arg1[%c1_74, %321, %c0_75] : memref<15x16x128xf32, #tpu.memory_space<vmem>>, vector<1x8x128xf32>
    %323 = vector.shape_cast %322 : vector<1x8x128xf32> to vector<8x128xf32>
    %c1_76 = arith.constant 1 : index
    %324 = arith.index_cast %3 : i32 to index
    %c0_77 = arith.constant 0 : index
    %325 = vector.load %arg2[%c1_76, %324, %c0_77] : memref<15x16x128xf32, #tpu.memory_space<vmem>>, vector<1x8x128xf32>
    %326 = vector.shape_cast %325 : vector<1x8x128xf32> to vector<8x128xf32>
    %327 = arith.subf %323, %326 : vector<8x128xf32>
    %328 = arith.mulf %327, %327 : vector<8x128xf32>
    %329 = arith.addf %320, %328 : vector<8x128xf32>
    %c2_78 = arith.constant 2 : index
    %330 = arith.index_cast %3 : i32 to index
    %c0_79 = arith.constant 0 : index
    %331 = vector.load %arg1[%c2_78, %330, %c0_79] : memref<15x16x128xf32, #tpu.memory_space<vmem>>, vector<1x8x128xf32>
    %332 = vector.shape_cast %331 : vector<1x8x128xf32> to vector<8x128xf32>
    %c2_80 = arith.constant 2 : index
    %333 = arith.index_cast %3 : i32 to index
    %c0_81 = arith.constant 0 : index
    %334 = vector.load %arg2[%c2_80, %333, %c0_81] : memref<15x16x128xf32, #tpu.memory_space<vmem>>, vector<1x8x128xf32>
    %335 = vector.shape_cast %334 : vector<1x8x128xf32> to vector<8x128xf32>
    %336 = arith.subf %332, %335 : vector<8x128xf32>
    %337 = arith.mulf %336, %336 : vector<8x128xf32>
    %338 = arith.addf %329, %337 : vector<8x128xf32>
    %c3_82 = arith.constant 3 : index
    %339 = arith.index_cast %3 : i32 to index
    %c0_83 = arith.constant 0 : index
    %340 = vector.load %arg1[%c3_82, %339, %c0_83] : memref<15x16x128xf32, #tpu.memory_space<vmem>>, vector<1x8x128xf32>
    %341 = vector.shape_cast %340 : vector<1x8x128xf32> to vector<8x128xf32>
    %c4_84 = arith.constant 4 : index
    %342 = arith.index_cast %3 : i32 to index
    %c0_85 = arith.constant 0 : index
    %343 = vector.load %arg1[%c4_84, %342, %c0_85] : memref<15x16x128xf32, #tpu.memory_space<vmem>>, vector<1x8x128xf32>
    %344 = vector.shape_cast %343 : vector<1x8x128xf32> to vector<8x128xf32>
    %c5_86 = arith.constant 5 : index
    %345 = arith.index_cast %3 : i32 to index
    %c0_87 = arith.constant 0 : index
    %346 = vector.load %arg1[%c5_86, %345, %c0_87] : memref<15x16x128xf32, #tpu.memory_space<vmem>>, vector<1x8x128xf32>
    %347 = vector.shape_cast %346 : vector<1x8x128xf32> to vector<8x128xf32>
    %c3_88 = arith.constant 3 : index
    %348 = arith.index_cast %3 : i32 to index
    %c0_89 = arith.constant 0 : index
    %349 = vector.load %arg2[%c3_88, %348, %c0_89] : memref<15x16x128xf32, #tpu.memory_space<vmem>>, vector<1x8x128xf32>
    %350 = vector.shape_cast %349 : vector<1x8x128xf32> to vector<8x128xf32>
    %c4_90 = arith.constant 4 : index
    %351 = arith.index_cast %3 : i32 to index
    %c0_91 = arith.constant 0 : index
    %352 = vector.load %arg2[%c4_90, %351, %c0_91] : memref<15x16x128xf32, #tpu.memory_space<vmem>>, vector<1x8x128xf32>
    %353 = vector.shape_cast %352 : vector<1x8x128xf32> to vector<8x128xf32>
    %c5_92 = arith.constant 5 : index
    %354 = arith.index_cast %3 : i32 to index
    %c0_93 = arith.constant 0 : index
    %355 = vector.load %arg2[%c5_92, %354, %c0_93] : memref<15x16x128xf32, #tpu.memory_space<vmem>>, vector<1x8x128xf32>
    %356 = vector.shape_cast %355 : vector<1x8x128xf32> to vector<8x128xf32>
    %c6_94 = arith.constant 6 : index
    %357 = arith.index_cast %3 : i32 to index
    %c0_95 = arith.constant 0 : index
    %358 = vector.load %arg1[%c6_94, %357, %c0_95] : memref<15x16x128xf32, #tpu.memory_space<vmem>>, vector<1x8x128xf32>
    %359 = vector.shape_cast %358 : vector<1x8x128xf32> to vector<8x128xf32>
    %c7_96 = arith.constant 7 : index
    %360 = arith.index_cast %3 : i32 to index
    %c0_97 = arith.constant 0 : index
    %361 = vector.load %arg1[%c7_96, %360, %c0_97] : memref<15x16x128xf32, #tpu.memory_space<vmem>>, vector<1x8x128xf32>
    %362 = vector.shape_cast %361 : vector<1x8x128xf32> to vector<8x128xf32>
    %c8_98 = arith.constant 8 : index
    %363 = arith.index_cast %3 : i32 to index
    %c0_99 = arith.constant 0 : index
    %364 = vector.load %arg1[%c8_98, %363, %c0_99] : memref<15x16x128xf32, #tpu.memory_space<vmem>>, vector<1x8x128xf32>
    %365 = vector.shape_cast %364 : vector<1x8x128xf32> to vector<8x128xf32>
    %c9_100 = arith.constant 9 : index
    %366 = arith.index_cast %3 : i32 to index
    %c0_101 = arith.constant 0 : index
    %367 = vector.load %arg1[%c9_100, %366, %c0_101] : memref<15x16x128xf32, #tpu.memory_space<vmem>>, vector<1x8x128xf32>
    %368 = vector.shape_cast %367 : vector<1x8x128xf32> to vector<8x128xf32>
    %c10_102 = arith.constant 10 : index
    %369 = arith.index_cast %3 : i32 to index
    %c0_103 = arith.constant 0 : index
    %370 = vector.load %arg1[%c10_102, %369, %c0_103] : memref<15x16x128xf32, #tpu.memory_space<vmem>>, vector<1x8x128xf32>
    %371 = vector.shape_cast %370 : vector<1x8x128xf32> to vector<8x128xf32>
    %c11_104 = arith.constant 11 : index
    %372 = arith.index_cast %3 : i32 to index
    %c0_105 = arith.constant 0 : index
    %373 = vector.load %arg1[%c11_104, %372, %c0_105] : memref<15x16x128xf32, #tpu.memory_space<vmem>>, vector<1x8x128xf32>
    %374 = vector.shape_cast %373 : vector<1x8x128xf32> to vector<8x128xf32>
    %c12_106 = arith.constant 12 : index
    %375 = arith.index_cast %3 : i32 to index
    %c0_107 = arith.constant 0 : index
    %376 = vector.load %arg1[%c12_106, %375, %c0_107] : memref<15x16x128xf32, #tpu.memory_space<vmem>>, vector<1x8x128xf32>
    %377 = vector.shape_cast %376 : vector<1x8x128xf32> to vector<8x128xf32>
    %c13_108 = arith.constant 13 : index
    %378 = arith.index_cast %3 : i32 to index
    %c0_109 = arith.constant 0 : index
    %379 = vector.load %arg1[%c13_108, %378, %c0_109] : memref<15x16x128xf32, #tpu.memory_space<vmem>>, vector<1x8x128xf32>
    %380 = vector.shape_cast %379 : vector<1x8x128xf32> to vector<8x128xf32>
    %c14_110 = arith.constant 14 : index
    %381 = arith.index_cast %3 : i32 to index
    %c0_111 = arith.constant 0 : index
    %382 = vector.load %arg1[%c14_110, %381, %c0_111] : memref<15x16x128xf32, #tpu.memory_space<vmem>>, vector<1x8x128xf32>
    %383 = vector.shape_cast %382 : vector<1x8x128xf32> to vector<8x128xf32>
    %c6_112 = arith.constant 6 : index
    %384 = arith.index_cast %3 : i32 to index
    %c0_113 = arith.constant 0 : index
    %385 = vector.load %arg2[%c6_112, %384, %c0_113] : memref<15x16x128xf32, #tpu.memory_space<vmem>>, vector<1x8x128xf32>
    %386 = vector.shape_cast %385 : vector<1x8x128xf32> to vector<8x128xf32>
    %c7_114 = arith.constant 7 : index
    %387 = arith.index_cast %3 : i32 to index
    %c0_115 = arith.constant 0 : index
    %388 = vector.load %arg2[%c7_114, %387, %c0_115] : memref<15x16x128xf32, #tpu.memory_space<vmem>>, vector<1x8x128xf32>
    %389 = vector.shape_cast %388 : vector<1x8x128xf32> to vector<8x128xf32>
    %c8_116 = arith.constant 8 : index
    %390 = arith.index_cast %3 : i32 to index
    %c0_117 = arith.constant 0 : index
    %391 = vector.load %arg2[%c8_116, %390, %c0_117] : memref<15x16x128xf32, #tpu.memory_space<vmem>>, vector<1x8x128xf32>
    %392 = vector.shape_cast %391 : vector<1x8x128xf32> to vector<8x128xf32>
    %c9_118 = arith.constant 9 : index
    %393 = arith.index_cast %3 : i32 to index
    %c0_119 = arith.constant 0 : index
    %394 = vector.load %arg2[%c9_118, %393, %c0_119] : memref<15x16x128xf32, #tpu.memory_space<vmem>>, vector<1x8x128xf32>
    %395 = vector.shape_cast %394 : vector<1x8x128xf32> to vector<8x128xf32>
    %c10_120 = arith.constant 10 : index
    %396 = arith.index_cast %3 : i32 to index
    %c0_121 = arith.constant 0 : index
    %397 = vector.load %arg2[%c10_120, %396, %c0_121] : memref<15x16x128xf32, #tpu.memory_space<vmem>>, vector<1x8x128xf32>
    %398 = vector.shape_cast %397 : vector<1x8x128xf32> to vector<8x128xf32>
    %c11_122 = arith.constant 11 : index
    %399 = arith.index_cast %3 : i32 to index
    %c0_123 = arith.constant 0 : index
    %400 = vector.load %arg2[%c11_122, %399, %c0_123] : memref<15x16x128xf32, #tpu.memory_space<vmem>>, vector<1x8x128xf32>
    %401 = vector.shape_cast %400 : vector<1x8x128xf32> to vector<8x128xf32>
    %c12_124 = arith.constant 12 : index
    %402 = arith.index_cast %3 : i32 to index
    %c0_125 = arith.constant 0 : index
    %403 = vector.load %arg2[%c12_124, %402, %c0_125] : memref<15x16x128xf32, #tpu.memory_space<vmem>>, vector<1x8x128xf32>
    %404 = vector.shape_cast %403 : vector<1x8x128xf32> to vector<8x128xf32>
    %c13_126 = arith.constant 13 : index
    %405 = arith.index_cast %3 : i32 to index
    %c0_127 = arith.constant 0 : index
    %406 = vector.load %arg2[%c13_126, %405, %c0_127] : memref<15x16x128xf32, #tpu.memory_space<vmem>>, vector<1x8x128xf32>
    %407 = vector.shape_cast %406 : vector<1x8x128xf32> to vector<8x128xf32>
    %c14_128 = arith.constant 14 : index
    %408 = arith.index_cast %3 : i32 to index
    %c0_129 = arith.constant 0 : index
    %409 = vector.load %arg2[%c14_128, %408, %c0_129] : memref<15x16x128xf32, #tpu.memory_space<vmem>>, vector<1x8x128xf32>
    %410 = vector.shape_cast %409 : vector<1x8x128xf32> to vector<8x128xf32>
    %411 = math.sqrt %341 : vector<8x128xf32>
    %412 = math.sqrt %344 : vector<8x128xf32>
    %413 = math.sqrt %347 : vector<8x128xf32>
    %414 = arith.mulf %386, %350 : vector<8x128xf32>
    %415 = arith.mulf %414, %386 : vector<8x128xf32>
    %cst_130 = arith.constant 0.000000e+00 : f32
    %416 = vector.broadcast %cst_130 : f32 to vector<8x128xf32>
    %417 = arith.addf %416, %415 : vector<8x128xf32>
    %418 = arith.mulf %389, %353 : vector<8x128xf32>
    %419 = arith.mulf %418, %389 : vector<8x128xf32>
    %420 = arith.addf %417, %419 : vector<8x128xf32>
    %421 = arith.mulf %392, %356 : vector<8x128xf32>
    %422 = arith.mulf %421, %392 : vector<8x128xf32>
    %423 = arith.addf %420, %422 : vector<8x128xf32>
    %424 = arith.mulf %386, %350 : vector<8x128xf32>
    %425 = arith.mulf %424, %395 : vector<8x128xf32>
    %cst_131 = arith.constant 0.000000e+00 : f32
    %426 = vector.broadcast %cst_131 : f32 to vector<8x128xf32>
    %427 = arith.addf %426, %425 : vector<8x128xf32>
    %428 = arith.mulf %389, %353 : vector<8x128xf32>
    %429 = arith.mulf %428, %398 : vector<8x128xf32>
    %430 = arith.addf %427, %429 : vector<8x128xf32>
    %431 = arith.mulf %392, %356 : vector<8x128xf32>
    %432 = arith.mulf %431, %401 : vector<8x128xf32>
    %433 = arith.addf %430, %432 : vector<8x128xf32>
    %434 = arith.mulf %386, %350 : vector<8x128xf32>
    %435 = arith.mulf %434, %404 : vector<8x128xf32>
    %cst_132 = arith.constant 0.000000e+00 : f32
    %436 = vector.broadcast %cst_132 : f32 to vector<8x128xf32>
    %437 = arith.addf %436, %435 : vector<8x128xf32>
    %438 = arith.mulf %389, %353 : vector<8x128xf32>
    %439 = arith.mulf %438, %407 : vector<8x128xf32>
    %440 = arith.addf %437, %439 : vector<8x128xf32>
    %441 = arith.mulf %392, %356 : vector<8x128xf32>
    %442 = arith.mulf %441, %410 : vector<8x128xf32>
    %443 = arith.addf %440, %442 : vector<8x128xf32>
    %444 = arith.mulf %395, %350 : vector<8x128xf32>
    %445 = arith.mulf %444, %395 : vector<8x128xf32>
    %cst_133 = arith.constant 0.000000e+00 : f32
    %446 = vector.broadcast %cst_133 : f32 to vector<8x128xf32>
    %447 = arith.addf %446, %445 : vector<8x128xf32>
    %448 = arith.mulf %398, %353 : vector<8x128xf32>
    %449 = arith.mulf %448, %398 : vector<8x128xf32>
    %450 = arith.addf %447, %449 : vector<8x128xf32>
    %451 = arith.mulf %401, %356 : vector<8x128xf32>
    %452 = arith.mulf %451, %401 : vector<8x128xf32>
    %453 = arith.addf %450, %452 : vector<8x128xf32>
    %454 = arith.mulf %395, %350 : vector<8x128xf32>
    %455 = arith.mulf %454, %404 : vector<8x128xf32>
    %cst_134 = arith.constant 0.000000e+00 : f32
    %456 = vector.broadcast %cst_134 : f32 to vector<8x128xf32>
    %457 = arith.addf %456, %455 : vector<8x128xf32>
    %458 = arith.mulf %398, %353 : vector<8x128xf32>
    %459 = arith.mulf %458, %407 : vector<8x128xf32>
    %460 = arith.addf %457, %459 : vector<8x128xf32>
    %461 = arith.mulf %401, %356 : vector<8x128xf32>
    %462 = arith.mulf %461, %410 : vector<8x128xf32>
    %463 = arith.addf %460, %462 : vector<8x128xf32>
    %464 = arith.mulf %404, %350 : vector<8x128xf32>
    %465 = arith.mulf %464, %404 : vector<8x128xf32>
    %cst_135 = arith.constant 0.000000e+00 : f32
    %466 = vector.broadcast %cst_135 : f32 to vector<8x128xf32>
    %467 = arith.addf %466, %465 : vector<8x128xf32>
    %468 = arith.mulf %407, %353 : vector<8x128xf32>
    %469 = arith.mulf %468, %407 : vector<8x128xf32>
    %470 = arith.addf %467, %469 : vector<8x128xf32>
    %471 = arith.mulf %410, %356 : vector<8x128xf32>
    %472 = arith.mulf %471, %410 : vector<8x128xf32>
    %473 = arith.addf %470, %472 : vector<8x128xf32>
    %474 = arith.mulf %423, %359 : vector<8x128xf32>
    %cst_136 = arith.constant 0.000000e+00 : f32
    %475 = vector.broadcast %cst_136 : f32 to vector<8x128xf32>
    %476 = arith.addf %475, %474 : vector<8x128xf32>
    %477 = arith.mulf %433, %368 : vector<8x128xf32>
    %478 = arith.addf %476, %477 : vector<8x128xf32>
    %479 = arith.mulf %443, %377 : vector<8x128xf32>
    %480 = arith.addf %478, %479 : vector<8x128xf32>
    %481 = arith.mulf %423, %362 : vector<8x128xf32>
    %cst_137 = arith.constant 0.000000e+00 : f32
    %482 = vector.broadcast %cst_137 : f32 to vector<8x128xf32>
    %483 = arith.addf %482, %481 : vector<8x128xf32>
    %484 = arith.mulf %433, %371 : vector<8x128xf32>
    %485 = arith.addf %483, %484 : vector<8x128xf32>
    %486 = arith.mulf %443, %380 : vector<8x128xf32>
    %487 = arith.addf %485, %486 : vector<8x128xf32>
    %488 = arith.mulf %423, %365 : vector<8x128xf32>
    %cst_138 = arith.constant 0.000000e+00 : f32
    %489 = vector.broadcast %cst_138 : f32 to vector<8x128xf32>
    %490 = arith.addf %489, %488 : vector<8x128xf32>
    %491 = arith.mulf %433, %374 : vector<8x128xf32>
    %492 = arith.addf %490, %491 : vector<8x128xf32>
    %493 = arith.mulf %443, %383 : vector<8x128xf32>
    %494 = arith.addf %492, %493 : vector<8x128xf32>
    %495 = arith.mulf %433, %359 : vector<8x128xf32>
    %cst_139 = arith.constant 0.000000e+00 : f32
    %496 = vector.broadcast %cst_139 : f32 to vector<8x128xf32>
    %497 = arith.addf %496, %495 : vector<8x128xf32>
    %498 = arith.mulf %453, %368 : vector<8x128xf32>
    %499 = arith.addf %497, %498 : vector<8x128xf32>
    %500 = arith.mulf %463, %377 : vector<8x128xf32>
    %501 = arith.addf %499, %500 : vector<8x128xf32>
    %502 = arith.mulf %433, %362 : vector<8x128xf32>
    %cst_140 = arith.constant 0.000000e+00 : f32
    %503 = vector.broadcast %cst_140 : f32 to vector<8x128xf32>
    %504 = arith.addf %503, %502 : vector<8x128xf32>
    %505 = arith.mulf %453, %371 : vector<8x128xf32>
    %506 = arith.addf %504, %505 : vector<8x128xf32>
    %507 = arith.mulf %463, %380 : vector<8x128xf32>
    %508 = arith.addf %506, %507 : vector<8x128xf32>
    %509 = arith.mulf %433, %365 : vector<8x128xf32>
    %cst_141 = arith.constant 0.000000e+00 : f32
    %510 = vector.broadcast %cst_141 : f32 to vector<8x128xf32>
    %511 = arith.addf %510, %509 : vector<8x128xf32>
    %512 = arith.mulf %453, %374 : vector<8x128xf32>
    %513 = arith.addf %511, %512 : vector<8x128xf32>
    %514 = arith.mulf %463, %383 : vector<8x128xf32>
    %515 = arith.addf %513, %514 : vector<8x128xf32>
    %516 = arith.mulf %443, %359 : vector<8x128xf32>
    %cst_142 = arith.constant 0.000000e+00 : f32
    %517 = vector.broadcast %cst_142 : f32 to vector<8x128xf32>
    %518 = arith.addf %517, %516 : vector<8x128xf32>
    %519 = arith.mulf %463, %368 : vector<8x128xf32>
    %520 = arith.addf %518, %519 : vector<8x128xf32>
    %521 = arith.mulf %473, %377 : vector<8x128xf32>
    %522 = arith.addf %520, %521 : vector<8x128xf32>
    %523 = arith.mulf %443, %362 : vector<8x128xf32>
    %cst_143 = arith.constant 0.000000e+00 : f32
    %524 = vector.broadcast %cst_143 : f32 to vector<8x128xf32>
    %525 = arith.addf %524, %523 : vector<8x128xf32>
    %526 = arith.mulf %463, %371 : vector<8x128xf32>
    %527 = arith.addf %525, %526 : vector<8x128xf32>
    %528 = arith.mulf %473, %380 : vector<8x128xf32>
    %529 = arith.addf %527, %528 : vector<8x128xf32>
    %530 = arith.mulf %443, %365 : vector<8x128xf32>
    %cst_144 = arith.constant 0.000000e+00 : f32
    %531 = vector.broadcast %cst_144 : f32 to vector<8x128xf32>
    %532 = arith.addf %531, %530 : vector<8x128xf32>
    %533 = arith.mulf %463, %374 : vector<8x128xf32>
    %534 = arith.addf %532, %533 : vector<8x128xf32>
    %535 = arith.mulf %473, %383 : vector<8x128xf32>
    %536 = arith.addf %534, %535 : vector<8x128xf32>
    %537 = arith.mulf %359, %480 : vector<8x128xf32>
    %cst_145 = arith.constant 0.000000e+00 : f32
    %538 = vector.broadcast %cst_145 : f32 to vector<8x128xf32>
    %539 = arith.addf %538, %537 : vector<8x128xf32>
    %540 = arith.mulf %368, %501 : vector<8x128xf32>
    %541 = arith.addf %539, %540 : vector<8x128xf32>
    %542 = arith.mulf %377, %522 : vector<8x128xf32>
    %543 = arith.addf %541, %542 : vector<8x128xf32>
    %544 = arith.mulf %359, %487 : vector<8x128xf32>
    %cst_146 = arith.constant 0.000000e+00 : f32
    %545 = vector.broadcast %cst_146 : f32 to vector<8x128xf32>
    %546 = arith.addf %545, %544 : vector<8x128xf32>
    %547 = arith.mulf %368, %508 : vector<8x128xf32>
    %548 = arith.addf %546, %547 : vector<8x128xf32>
    %549 = arith.mulf %377, %529 : vector<8x128xf32>
    %550 = arith.addf %548, %549 : vector<8x128xf32>
    %551 = arith.mulf %359, %494 : vector<8x128xf32>
    %cst_147 = arith.constant 0.000000e+00 : f32
    %552 = vector.broadcast %cst_147 : f32 to vector<8x128xf32>
    %553 = arith.addf %552, %551 : vector<8x128xf32>
    %554 = arith.mulf %368, %515 : vector<8x128xf32>
    %555 = arith.addf %553, %554 : vector<8x128xf32>
    %556 = arith.mulf %377, %536 : vector<8x128xf32>
    %557 = arith.addf %555, %556 : vector<8x128xf32>
    %558 = arith.mulf %362, %487 : vector<8x128xf32>
    %cst_148 = arith.constant 0.000000e+00 : f32
    %559 = vector.broadcast %cst_148 : f32 to vector<8x128xf32>
    %560 = arith.addf %559, %558 : vector<8x128xf32>
    %561 = arith.mulf %371, %508 : vector<8x128xf32>
    %562 = arith.addf %560, %561 : vector<8x128xf32>
    %563 = arith.mulf %380, %529 : vector<8x128xf32>
    %564 = arith.addf %562, %563 : vector<8x128xf32>
    %565 = arith.mulf %362, %494 : vector<8x128xf32>
    %cst_149 = arith.constant 0.000000e+00 : f32
    %566 = vector.broadcast %cst_149 : f32 to vector<8x128xf32>
    %567 = arith.addf %566, %565 : vector<8x128xf32>
    %568 = arith.mulf %371, %515 : vector<8x128xf32>
    %569 = arith.addf %567, %568 : vector<8x128xf32>
    %570 = arith.mulf %380, %536 : vector<8x128xf32>
    %571 = arith.addf %569, %570 : vector<8x128xf32>
    %572 = arith.mulf %365, %494 : vector<8x128xf32>
    %cst_150 = arith.constant 0.000000e+00 : f32
    %573 = vector.broadcast %cst_150 : f32 to vector<8x128xf32>
    %574 = arith.addf %573, %572 : vector<8x128xf32>
    %575 = arith.mulf %374, %515 : vector<8x128xf32>
    %576 = arith.addf %574, %575 : vector<8x128xf32>
    %577 = arith.mulf %383, %536 : vector<8x128xf32>
    %578 = arith.addf %576, %577 : vector<8x128xf32>
    %579 = arith.mulf %341, %543 : vector<8x128xf32>
    %580 = arith.mulf %344, %564 : vector<8x128xf32>
    %581 = arith.mulf %347, %578 : vector<8x128xf32>
    %582 = arith.mulf %411, %412 : vector<8x128xf32>
    %583 = arith.mulf %582, %550 : vector<8x128xf32>
    %584 = arith.mulf %411, %413 : vector<8x128xf32>
    %585 = arith.mulf %584, %557 : vector<8x128xf32>
    %586 = arith.mulf %412, %413 : vector<8x128xf32>
    %587 = arith.mulf %586, %571 : vector<8x128xf32>
    %588 = arith.addf %579, %580 : vector<8x128xf32>
    %589 = arith.addf %588, %581 : vector<8x128xf32>
    %cst_151 = arith.constant 0.000000e+00 : f32
    %590 = vector.broadcast %cst_151 : f32 to vector<8x128xf32>
    %591 = arith.maximumf %589, %590 : vector<8x128xf32>
    %592 = arith.mulf %579, %580 : vector<8x128xf32>
    %593 = arith.mulf %583, %583 : vector<8x128xf32>
    %594 = arith.subf %592, %593 : vector<8x128xf32>
    %595 = arith.mulf %579, %581 : vector<8x128xf32>
    %596 = arith.addf %594, %595 : vector<8x128xf32>
    %597 = arith.mulf %585, %585 : vector<8x128xf32>
    %598 = arith.subf %596, %597 : vector<8x128xf32>
    %599 = arith.mulf %580, %581 : vector<8x128xf32>
    %600 = arith.addf %598, %599 : vector<8x128xf32>
    %601 = arith.mulf %587, %587 : vector<8x128xf32>
    %602 = arith.subf %600, %601 : vector<8x128xf32>
    %cst_152 = arith.constant 0.000000e+00 : f32
    %603 = vector.broadcast %cst_152 : f32 to vector<8x128xf32>
    %604 = arith.maximumf %602, %603 : vector<8x128xf32>
    %605 = arith.mulf %341, %344 : vector<8x128xf32>
    %606 = arith.mulf %605, %347 : vector<8x128xf32>
    %607 = arith.mulf %350, %353 : vector<8x128xf32>
    %608 = arith.mulf %607, %356 : vector<8x128xf32>
    %609 = arith.mulf %606, %608 : vector<8x128xf32>
    %610 = math.sqrt %609 : vector<8x128xf32>
    %cst_153 = arith.constant 2.000000e+00 : f32
    %611 = vector.broadcast %cst_153 : f32 to vector<8x128xf32>
    %612 = arith.mulf %611, %610 : vector<8x128xf32>
    %613 = arith.addf %341, %344 : vector<8x128xf32>
    %614 = arith.addf %613, %347 : vector<8x128xf32>
    %615 = arith.addf %350, %353 : vector<8x128xf32>
    %616 = arith.addf %615, %356 : vector<8x128xf32>
    %617 = arith.addf %614, %616 : vector<8x128xf32>
    %618 = math.sqrt %284 : vector<8x128xf32>
    %619 = math.sqrt %591 : vector<8x128xf32>
    %620 = arith.mulf %305, %618 : vector<8x128xf32>
    %621 = arith.addf %297, %620 : vector<8x128xf32>
    %622 = math.sqrt %621 : vector<8x128xf32>
    %623 = arith.mulf %612, %619 : vector<8x128xf32>
    %624 = arith.addf %604, %623 : vector<8x128xf32>
    %625 = math.sqrt %624 : vector<8x128xf32>
    %cst_154 = arith.constant 2.000000e+00 : f32
    %626 = vector.broadcast %cst_154 : f32 to vector<8x128xf32>
    %627 = arith.mulf %626, %622 : vector<8x128xf32>
    %628 = arith.addf %284, %627 : vector<8x128xf32>
    %629 = math.sqrt %628 : vector<8x128xf32>
    %cst_155 = arith.constant 2.000000e+00 : f32
    %630 = vector.broadcast %cst_155 : f32 to vector<8x128xf32>
    %631 = arith.mulf %630, %625 : vector<8x128xf32>
    %632 = arith.addf %591, %631 : vector<8x128xf32>
    %633 = math.sqrt %632 : vector<8x128xf32>
    %634 = arith.mulf %305, %629 : vector<8x128xf32>
    %635 = arith.addf %297, %634 : vector<8x128xf32>
    %636 = math.sqrt %635 : vector<8x128xf32>
    %637 = arith.mulf %612, %633 : vector<8x128xf32>
    %638 = arith.addf %604, %637 : vector<8x128xf32>
    %639 = math.sqrt %638 : vector<8x128xf32>
    %cst_156 = arith.constant 2.000000e+00 : f32
    %640 = vector.broadcast %cst_156 : f32 to vector<8x128xf32>
    %641 = arith.mulf %640, %636 : vector<8x128xf32>
    %642 = arith.addf %284, %641 : vector<8x128xf32>
    %643 = math.sqrt %642 : vector<8x128xf32>
    %cst_157 = arith.constant 2.000000e+00 : f32
    %644 = vector.broadcast %cst_157 : f32 to vector<8x128xf32>
    %645 = arith.mulf %644, %639 : vector<8x128xf32>
    %646 = arith.addf %591, %645 : vector<8x128xf32>
    %647 = math.sqrt %646 : vector<8x128xf32>
    %648 = arith.mulf %305, %643 : vector<8x128xf32>
    %649 = arith.addf %297, %648 : vector<8x128xf32>
    %650 = math.sqrt %649 : vector<8x128xf32>
    %651 = arith.mulf %612, %647 : vector<8x128xf32>
    %652 = arith.addf %604, %651 : vector<8x128xf32>
    %653 = math.sqrt %652 : vector<8x128xf32>
    %cst_158 = arith.constant 2.000000e+00 : f32
    %654 = vector.broadcast %cst_158 : f32 to vector<8x128xf32>
    %655 = arith.mulf %654, %650 : vector<8x128xf32>
    %656 = arith.addf %284, %655 : vector<8x128xf32>
    %657 = math.sqrt %656 : vector<8x128xf32>
    %cst_159 = arith.constant 2.000000e+00 : f32
    %658 = vector.broadcast %cst_159 : f32 to vector<8x128xf32>
    %659 = arith.mulf %658, %653 : vector<8x128xf32>
    %660 = arith.addf %591, %659 : vector<8x128xf32>
    %661 = math.sqrt %660 : vector<8x128xf32>
    %662 = arith.mulf %305, %657 : vector<8x128xf32>
    %663 = arith.addf %297, %662 : vector<8x128xf32>
    %664 = math.sqrt %663 : vector<8x128xf32>
    %665 = arith.mulf %612, %661 : vector<8x128xf32>
    %666 = arith.addf %604, %665 : vector<8x128xf32>
    %667 = math.sqrt %666 : vector<8x128xf32>
    %cst_160 = arith.constant 2.000000e+00 : f32
    %668 = vector.broadcast %cst_160 : f32 to vector<8x128xf32>
    %669 = arith.mulf %668, %664 : vector<8x128xf32>
    %670 = arith.addf %284, %669 : vector<8x128xf32>
    %671 = math.sqrt %670 : vector<8x128xf32>
    %cst_161 = arith.constant 2.000000e+00 : f32
    %672 = vector.broadcast %cst_161 : f32 to vector<8x128xf32>
    %673 = arith.mulf %672, %667 : vector<8x128xf32>
    %674 = arith.addf %591, %673 : vector<8x128xf32>
    %675 = math.sqrt %674 : vector<8x128xf32>
    %676 = arith.mulf %305, %671 : vector<8x128xf32>
    %677 = arith.addf %297, %676 : vector<8x128xf32>
    %678 = math.sqrt %677 : vector<8x128xf32>
    %679 = arith.mulf %612, %675 : vector<8x128xf32>
    %680 = arith.addf %604, %679 : vector<8x128xf32>
    %681 = math.sqrt %680 : vector<8x128xf32>
    %cst_162 = arith.constant 2.000000e+00 : f32
    %682 = vector.broadcast %cst_162 : f32 to vector<8x128xf32>
    %683 = arith.mulf %682, %678 : vector<8x128xf32>
    %684 = arith.addf %284, %683 : vector<8x128xf32>
    %685 = math.sqrt %684 : vector<8x128xf32>
    %cst_163 = arith.constant 2.000000e+00 : f32
    %686 = vector.broadcast %cst_163 : f32 to vector<8x128xf32>
    %687 = arith.mulf %686, %681 : vector<8x128xf32>
    %688 = arith.addf %591, %687 : vector<8x128xf32>
    %689 = math.sqrt %688 : vector<8x128xf32>
    %690 = arith.mulf %305, %685 : vector<8x128xf32>
    %691 = arith.addf %297, %690 : vector<8x128xf32>
    %692 = math.sqrt %691 : vector<8x128xf32>
    %693 = arith.mulf %612, %689 : vector<8x128xf32>
    %694 = arith.addf %604, %693 : vector<8x128xf32>
    %695 = math.sqrt %694 : vector<8x128xf32>
    %cst_164 = arith.constant 2.000000e+00 : f32
    %696 = vector.broadcast %cst_164 : f32 to vector<8x128xf32>
    %697 = arith.mulf %696, %692 : vector<8x128xf32>
    %698 = arith.addf %284, %697 : vector<8x128xf32>
    %699 = math.sqrt %698 : vector<8x128xf32>
    %cst_165 = arith.constant 2.000000e+00 : f32
    %700 = vector.broadcast %cst_165 : f32 to vector<8x128xf32>
    %701 = arith.mulf %700, %695 : vector<8x128xf32>
    %702 = arith.addf %591, %701 : vector<8x128xf32>
    %703 = math.sqrt %702 : vector<8x128xf32>
    %704 = arith.mulf %305, %699 : vector<8x128xf32>
    %705 = arith.addf %297, %704 : vector<8x128xf32>
    %706 = math.sqrt %705 : vector<8x128xf32>
    %707 = arith.mulf %612, %703 : vector<8x128xf32>
    %708 = arith.addf %604, %707 : vector<8x128xf32>
    %709 = math.sqrt %708 : vector<8x128xf32>
    %cst_166 = arith.constant 2.000000e+00 : f32
    %710 = vector.broadcast %cst_166 : f32 to vector<8x128xf32>
    %711 = arith.mulf %710, %706 : vector<8x128xf32>
    %712 = arith.addf %284, %711 : vector<8x128xf32>
    %713 = math.sqrt %712 : vector<8x128xf32>
    %cst_167 = arith.constant 2.000000e+00 : f32
    %714 = vector.broadcast %cst_167 : f32 to vector<8x128xf32>
    %715 = arith.mulf %714, %709 : vector<8x128xf32>
    %716 = arith.addf %591, %715 : vector<8x128xf32>
    %717 = math.sqrt %716 : vector<8x128xf32>
    %718 = arith.mulf %305, %713 : vector<8x128xf32>
    %719 = arith.addf %297, %718 : vector<8x128xf32>
    %720 = math.sqrt %719 : vector<8x128xf32>
    %721 = arith.mulf %612, %717 : vector<8x128xf32>
    %722 = arith.addf %604, %721 : vector<8x128xf32>
    %723 = math.sqrt %722 : vector<8x128xf32>
    %cst_168 = arith.constant 2.000000e+00 : f32
    %724 = vector.broadcast %cst_168 : f32 to vector<8x128xf32>
    %725 = arith.mulf %724, %720 : vector<8x128xf32>
    %726 = arith.addf %284, %725 : vector<8x128xf32>
    %727 = math.sqrt %726 : vector<8x128xf32>
    %cst_169 = arith.constant 2.000000e+00 : f32
    %728 = vector.broadcast %cst_169 : f32 to vector<8x128xf32>
    %729 = arith.mulf %728, %723 : vector<8x128xf32>
    %730 = arith.addf %591, %729 : vector<8x128xf32>
    %731 = math.sqrt %730 : vector<8x128xf32>
    %cst_170 = arith.constant 2.000000e+00 : f32
    %732 = vector.broadcast %cst_170 : f32 to vector<8x128xf32>
    %733 = arith.mulf %732, %727 : vector<8x128xf32>
    %734 = arith.subf %310, %733 : vector<8x128xf32>
    %cst_171 = arith.constant 0.000000e+00 : f32
    %735 = vector.broadcast %cst_171 : f32 to vector<8x128xf32>
    %736 = arith.maximumf %734, %735 : vector<8x128xf32>
    %737 = arith.addf %31, %736 : vector<8x128xf32>
    %738 = math.sqrt %737 : vector<8x128xf32>
    %739 = arith.index_cast %1 : i32 to index
    %c0_172 = arith.constant 0 : index
    %740 = vector.load %arg3[%739, %c0_172] : memref<16x128xf32, #tpu.memory_space<vmem>>, vector<8x128xf32>
    tpu.vector_store %arg3[%739, %c0_172], %738 {strides = array<i32>} : memref<16x128xf32, #tpu.memory_space<vmem>>, vector<8x128xf32>,
    %cst_173 = arith.constant 2.000000e+00 : f32
    %741 = vector.broadcast %cst_173 : f32 to vector<8x128xf32>
    %742 = arith.mulf %741, %731 : vector<8x128xf32>
    %743 = arith.subf %617, %742 : vector<8x128xf32>
    %cst_174 = arith.constant 0.000000e+00 : f32
    %744 = vector.broadcast %cst_174 : f32 to vector<8x128xf32>
    %745 = arith.maximumf %743, %744 : vector<8x128xf32>
    %746 = arith.addf %338, %745 : vector<8x128xf32>
    %747 = math.sqrt %746 : vector<8x128xf32>
    %748 = arith.index_cast %3 : i32 to index
    %c0_175 = arith.constant 0 : index
    %749 = vector.load %arg3[%748, %c0_175] : memref<16x128xf32, #tpu.memory_space<vmem>>, vector<8x128xf32>
    tpu.vector_store %arg3[%748, %c0_175], %747 {strides = array<i32>} : memref<16x128xf32, #tpu.memory_space<vmem>>, vector<8x128xf32>,
    %c1_i32 = arith.constant 1 : i32
    return
  }
  func.func @transform_0(%arg0: i32) -> (i32, i32, i32) {
    %c0_i32 = arith.constant 0 : i32
    %c0_i32_0 = arith.constant 0 : i32
    %c0_i32_1 = arith.constant 0 : i32
    return %c0_i32, %arg0, %c0_i32_0 : i32, i32, i32
  }
  func.func @transform_1(%arg0: i32) -> (i32, i32, i32) {
    %c0_i32 = arith.constant 0 : i32
    %c0_i32_0 = arith.constant 0 : i32
    %c0_i32_1 = arith.constant 0 : i32
    return %c0_i32, %arg0, %c0_i32_0 : i32, i32, i32
  }
  func.func @transform_2(%arg0: i32) -> (i32, i32) {
    %c0_i32 = arith.constant 0 : i32
    %c0_i32_0 = arith.constant 0 : i32
    return %arg0, %c0_i32 : i32, i32
  }
}

</mosaic_0001>

<llo_original>
// kernel: tpu_custom_call.1
$region0: #{tpu_custom_call.1}
  #allocation0 [shape = 'u32[]', space=smem, size = 0x4, offset = 0x4, fixed_abs, tag = 'smem constant byte address 0x4 - core index']
  #allocation1 [shape = 'u32[144,128]{1,0:T(1,128)}', space=vmem, size = 0x12000, scoped, tag = 'internal scratch']
  %s0 = inlined_call_operand.hbm [shape: f32[15,16,128], index: 0, kind: input, shape index: {}]
  %s1 = inlined_call_operand.hbm [shape: f32[15,16,128], index: 1, kind: input, shape index: {}]
  %s2 = inlined_call_operand.hbm [shape: f32[16,128], index: 2, kind: output, shape index: {}]
  %s3 = sld [smem:[#allocation0]]
  $region26: #{tpu_custom_call.1} parent=0
    _
  %s5 = ssub.s32 1, %s3
  %s6 = scalar_select 0, %s5, %s3
  $region1: #{tpu_custom_call.1} parent=0
    #allocation2 [shape = 'u8[122880]{0}', space=vmem, size = 0x1e000, scoped, tag = 'input window, operand 0, single buffered']
    #allocation3 [shape = 's32[1]{0}', space=sflag, size = 0x4, scoped, tag = 'scoped memory for tpu_custom_call.1']
    #allocation4 [shape = 's32[1]{0}', space=sflag, size = 0x4, scoped, tag = 'scoped memory for tpu_custom_call.1']
    #allocation5 [shape = 'u8[122880]{0}', space=vmem, size = 0x1e000, scoped, tag = 'input window, operand 1, single buffered']
    #allocation6 [shape = 's32[1]{0}', space=sflag, size = 0x4, scoped, tag = 'scoped memory for tpu_custom_call.1']
    #allocation7 [shape = 'u8[8192]{0}', space=vmem, size = 0x2000, scoped, tag = 'output window, operand 0, single buffered']
    %7 = vsyncpa [#allocation3], 0
    %8 = vsyncpa [#allocation6], 0
    %9 = vsyncpa [#allocation4], 0
    // Predicated region
    $region2: #{tpu_custom_call.1} parent=1 // pred_check
      _
    $region3: #{tpu_custom_call.1} parent=1 // pred_check_branch
      %11 = sbr.rel (0) target = $region5
    $region4: #{tpu_custom_call.1} parent=1 // pred_region
      %s13 = ssub.s32 3840, 3840
      %14 = vsyncadd [#allocation3], %s13
      %s15 = sshll.u32 [#allocation2], 4
      %s16 = int_to_ptr.vmem [resolvable:$true] %s15
      %21 = dma.hbm_to_vmem [thread:$0]  %s0, 3840, %s16, [#allocation3], 128, 128, 8
    $region5: #{tpu_custom_call.1} parent=1 // pred_fallthru
      _
    // Predicated region
    $region6: #{tpu_custom_call.1} parent=1 // pred_check
      _
    $region7: #{tpu_custom_call.1} parent=1 // pred_check_branch
      %23 = sbr.rel (0) target = $region9
    $region8: #{tpu_custom_call.1} parent=1 // pred_region
      %s25 = ssub.s32 3840, 3840
      %26 = vsyncadd [#allocation6], %s25
      %s27 = sshll.u32 [#allocation5], 4
      %s28 = int_to_ptr.vmem [resolvable:$true] %s27
      %33 = dma.hbm_to_vmem [thread:$0]  %s1, 3840, %s28, [#allocation6], 128, 128, 8
    $region9: #{tpu_custom_call.1} parent=1 // pred_fallthru
      _
    // Predicated region
    $region10: #{tpu_custom_call.1} parent=1 // pred_check
      _
    $region11: #{tpu_custom_call.1} parent=1 // pred_check_branch
      %35 = sbr.rel (0) target = $region13
    $region12: #{tpu_custom_call.1} parent=1 // pred_region
      %36 = dma.done [#allocation3], 3840
    $region13: #{tpu_custom_call.1} parent=1 // pred_fallthru
      _
    // Predicated region
    $region14: #{tpu_custom_call.1} parent=1 // pred_check
      _
    $region15: #{tpu_custom_call.1} parent=1 // pred_check_branch
      %38 = sbr.rel (0) target = $region17
    $region16: #{tpu_custom_call.1} parent=1 // pred_region
      %39 = dma.done [#allocation6], 3840
    $region17: #{tpu_custom_call.1} parent=1 // pred_fallthru
      _
    %s40 = sadd.s32 0, 8
    %v41 = vld [vmem:[#allocation2] sm:$0xff]
    %v42 = vld [vmem:[#allocation5] sm:$0xff]
    %v43 = vsub.f32 %v41, %v42
    %v44 = vmul.f32 %v43, %v43
    %v45 = vadd.f32 %v44, 0.0
    %s46 = sadd.s32 0, 16
    %s47 = scalar_lea.vmem [#allocation2], %s46
    %v48 = vld [vmem:[%s47] sm:$0xff]
    %s49 = scalar_lea.vmem [#allocation5], %s46
    %v50 = vld [vmem:[%s49] sm:$0xff]
    %v51 = vsub.f32 %v48, %v50
    %v52 = vmul.f32 %v51, %v51
    %v53 = vadd.f32 %v45, %v52
    %s54 = sadd.s32 0, 32
    %s55 = scalar_lea.vmem [#allocation2], %s54
    %v56 = vld [vmem:[%s55] sm:$0xff]
    %s57 = scalar_lea.vmem [#allocation5], %s54
    %v58 = vld [vmem:[%s57] sm:$0xff]
    %v59 = vsub.f32 %v56, %v58
    %v60 = vmul.f32 %v59, %v59
    %v61 = vadd.f32 %v53, %v60
    %s62 = sadd.s32 0, 48
    %s63 = scalar_lea.vmem [#allocation2], %s62
    %v64 = vld [vmem:[%s63] sm:$0xff]
    %s65 = sadd.s32 0, 64
    %s66 = scalar_lea.vmem [#allocation2], %s65
    %v67 = vld [vmem:[%s66] sm:$0xff]
    %s68 = sadd.s32 0, 80
    %s69 = scalar_lea.vmem [#allocation2], %s68
    %v70 = vld [vmem:[%s69] sm:$0xff]
    %s71 = scalar_lea.vmem [#allocation5], %s62
    %v72 = vld [vmem:[%s71] sm:$0xff]
    %s73 = scalar_lea.vmem [#allocation5], %s65
    %v74 = vld [vmem:[%s73] sm:$0xff]
    %s75 = scalar_lea.vmem [#allocation5], %s68
    %v76 = vld [vmem:[%s75] sm:$0xff]
    %s77 = sadd.s32 0, 96
    %s78 = scalar_lea.vmem [#allocation2], %s77
    %v79 = vld [vmem:[%s78] sm:$0xff]
    %s80 = sadd.s32 0, 112
    %s81 = scalar_lea.vmem [#allocation2], %s80
    %v82 = vld [vmem:[%s81] sm:$0xff]
    %s83 = sadd.s32 0, 128
    %s84 = scalar_lea.vmem [#allocation2], %s83
    %v85 = vld [vmem:[%s84] sm:$0xff]
    %s86 = sadd.s32 0, 144
    %s87 = scalar_lea.vmem [#allocation2], %s86
    %v88 = vld [vmem:[%s87] sm:$0xff]
    %s89 = sadd.s32 0, 160
    %s90 = scalar_lea.vmem [#allocation2], %s89
    %v91 = vld [vmem:[%s90] sm:$0xff]
    %s92 = sadd.s32 0, 176
    %s93 = scalar_lea.vmem [#allocation2], %s92
    %v94 = vld [vmem:[%s93] sm:$0xff]
    %s95 = sadd.s32 0, 192
    %s96 = scalar_lea.vmem [#allocation2], %s95
    %v97 = vld [vmem:[%s96] sm:$0xff]
    %s98 = sadd.s32 0, 208
    %s99 = scalar_lea.vmem [#allocation2], %s98
    %v100 = vld [vmem:[%s99] sm:$0xff]
    %s101 = sadd.s32 0, 224
    %s102 = scalar_lea.vmem [#allocation2], %s101
    %v103 = vld [vmem:[%s102] sm:$0xff]
    %s104 = scalar_lea.vmem [#allocation5], %s77
    %v105 = vld [vmem:[%s104] sm:$0xff]
    %s106 = scalar_lea.vmem [#allocation5], %s80
    %v107 = vld [vmem:[%s106] sm:$0xff]
    %s108 = scalar_lea.vmem [#allocation5], %s83
    %v109 = vld [vmem:[%s108] sm:$0xff]
    %s110 = scalar_lea.vmem [#allocation5], %s86
    %v111 = vld [vmem:[%s110] sm:$0xff]
    %s112 = scalar_lea.vmem [#allocation5], %s89
    %v113 = vld [vmem:[%s112] sm:$0xff]
    %s114 = scalar_lea.vmem [#allocation5], %s92
    %v115 = vld [vmem:[%s114] sm:$0xff]
    %s116 = scalar_lea.vmem [#allocation5], %s95
    %v117 = vld [vmem:[%s116] sm:$0xff]
    %s118 = scalar_lea.vmem [#allocation5], %s98
    %v119 = vld [vmem:[%s118] sm:$0xff]
    %s120 = scalar_lea.vmem [#allocation5], %s101
    %v121 = vld [vmem:[%s120] sm:$0xff]
    %v122 = vrsqrt.pop %v64
    %v123 = vmul.f32 %v64, %v122
    %vm124 = vcmp.eq.f32.partialorder %v64, inf
    %v125 = vsel %vm124, %v64, %v123
    %vm126 = vcmp.eq.f32.partialorder %v64, 0.0
    %v127 = vand.u32 %v64, 2147483648
    %v128 = vsel %vm126, %v127, %v125
    %v129 = vrsqrt.pop %v67
    %v130 = vmul.f32 %v67, %v129
    %vm131 = vcmp.eq.f32.partialorder %v67, inf
    %v132 = vsel %vm131, %v67, %v130
    %vm133 = vcmp.eq.f32.partialorder %v67, 0.0
    %v134 = vand.u32 %v67, 2147483648
    %v135 = vsel %vm133, %v134, %v132
    %v136 = vrsqrt.pop %v70
    %v137 = vmul.f32 %v70, %v136
    %vm138 = vcmp.eq.f32.partialorder %v70, inf
    %v139 = vsel %vm138, %v70, %v137
    %vm140 = vcmp.eq.f32.partialorder %v70, 0.0
    %v141 = vand.u32 %v70, 2147483648
    %v142 = vsel %vm140, %v141, %v139
    %v143 = vmul.f32 %v105, %v72
    %v144 = vmul.f32 %v143, %v105
    %v145 = vadd.f32 %v144, 0.0
    %v146 = vmul.f32 %v107, %v74
    %v147 = vmul.f32 %v146, %v107
    %v148 = vadd.f32 %v145, %v147
    %v149 = vmul.f32 %v109, %v76
    %v150 = vmul.f32 %v149, %v109
    %v151 = vadd.f32 %v148, %v150
    %v152 = vmul.f32 %v143, %v111
    %v153 = vadd.f32 %v152, 0.0
    %v154 = vmul.f32 %v146, %v113
    %v155 = vadd.f32 %v153, %v154
    %v156 = vmul.f32 %v149, %v115
    %v157 = vadd.f32 %v155, %v156
    %v158 = vmul.f32 %v143, %v117
    %v159 = vadd.f32 %v158, 0.0
    %v160 = vmul.f32 %v146, %v119
    %v161 = vadd.f32 %v159, %v160
    %v162 = vmul.f32 %v149, %v121
    %v163 = vadd.f32 %v161, %v162
    %v164 = vmul.f32 %v111, %v72
    %v165 = vmul.f32 %v164, %v111
    %v166 = vadd.f32 %v165, 0.0
    %v167 = vmul.f32 %v113, %v74
    %v168 = vmul.f32 %v167, %v113
    %v169 = vadd.f32 %v166, %v168
    %v170 = vmul.f32 %v115, %v76
    %v171 = vmul.f32 %v170, %v115
    %v172 = vadd.f32 %v169, %v171
    %v173 = vmul.f32 %v164, %v117
    %v174 = vadd.f32 %v173, 0.0
    %v175 = vmul.f32 %v167, %v119
    %v176 = vadd.f32 %v174, %v175
    %v177 = vmul.f32 %v170, %v121
    %v178 = vadd.f32 %v176, %v177
    %v179 = vmul.f32 %v117, %v72
    %v180 = vmul.f32 %v179, %v117
    %v181 = vadd.f32 %v180, 0.0
    %v182 = vmul.f32 %v119, %v74
    %v183 = vmul.f32 %v182, %v119
    %v184 = vadd.f32 %v181, %v183
    %v185 = vmul.f32 %v121, %v76
    %v186 = vmul.f32 %v185, %v121
    %v187 = vadd.f32 %v184, %v186
    %v188 = vmul.f32 %v151, %v79
    %v189 = vadd.f32 %v188, 0.0
    %v190 = vmul.f32 %v157, %v88
    %v191 = vadd.f32 %v189, %v190
    %v192 = vmul.f32 %v163, %v97
    %v193 = vadd.f32 %v191, %v192
    %v194 = vmul.f32 %v151, %v82
    %v195 = vadd.f32 %v194, 0.0
    %v196 = vmul.f32 %v157, %v91
    %v197 = vadd.f32 %v195, %v196
    %v198 = vmul.f32 %v163, %v100
    %v199 = vadd.f32 %v197, %v198
    %v200 = vmul.f32 %v151, %v85
    %v201 = vadd.f32 %v200, 0.0
    %v202 = vmul.f32 %v157, %v94
    %v203 = vadd.f32 %v201, %v202
    %v204 = vmul.f32 %v163, %v103
    %v205 = vadd.f32 %v203, %v204
    %v206 = vmul.f32 %v157, %v79
    %v207 = vadd.f32 %v206, 0.0
    %v208 = vmul.f32 %v172, %v88
    %v209 = vadd.f32 %v207, %v208
    %v210 = vmul.f32 %v178, %v97
    %v211 = vadd.f32 %v209, %v210
    %v212 = vmul.f32 %v157, %v82
    %v213 = vadd.f32 %v212, 0.0
    %v214 = vmul.f32 %v172, %v91
    %v215 = vadd.f32 %v213, %v214
    %v216 = vmul.f32 %v178, %v100
    %v217 = vadd.f32 %v215, %v216
    %v218 = vmul.f32 %v157, %v85
    %v219 = vadd.f32 %v218, 0.0
    %v220 = vmul.f32 %v172, %v94
    %v221 = vadd.f32 %v219, %v220
    %v222 = vmul.f32 %v178, %v103
    %v223 = vadd.f32 %v221, %v222
    %v224 = vmul.f32 %v163, %v79
    %v225 = vadd.f32 %v224, 0.0
    %v226 = vmul.f32 %v178, %v88
    %v227 = vadd.f32 %v225, %v226
    %v228 = vmul.f32 %v187, %v97
    %v229 = vadd.f32 %v227, %v228
    %v230 = vmul.f32 %v163, %v82
    %v231 = vadd.f32 %v230, 0.0
    %v232 = vmul.f32 %v178, %v91
    %v233 = vadd.f32 %v231, %v232
    %v234 = vmul.f32 %v187, %v100
    %v235 = vadd.f32 %v233, %v234
    %v236 = vmul.f32 %v163, %v85
    %v237 = vadd.f32 %v236, 0.0
    %v238 = vmul.f32 %v178, %v94
    %v239 = vadd.f32 %v237, %v238
    %v240 = vmul.f32 %v187, %v103
    %v241 = vadd.f32 %v239, %v240
    %v242 = vmul.f32 %v79, %v193
    %v243 = vadd.f32 %v242, 0.0
    %v244 = vmul.f32 %v88, %v211
    %v245 = vadd.f32 %v243, %v244
    %v246 = vmul.f32 %v97, %v229
    %v247 = vadd.f32 %v245, %v246
    %v248 = vmul.f32 %v79, %v199
    %v249 = vadd.f32 %v248, 0.0
    %v250 = vmul.f32 %v88, %v217
    %v251 = vadd.f32 %v249, %v250
    %v252 = vmul.f32 %v97, %v235
    %v253 = vadd.f32 %v251, %v252
    %v254 = vmul.f32 %v79, %v205
    %v255 = vadd.f32 %v254, 0.0
    %v256 = vmul.f32 %v88, %v223
    %v257 = vadd.f32 %v255, %v256
    %v258 = vmul.f32 %v97, %v241
    %v259 = vadd.f32 %v257, %v258
    %v260 = vmul.f32 %v82, %v199
    %v261 = vadd.f32 %v260, 0.0
    %v262 = vmul.f32 %v91, %v217
    %v263 = vadd.f32 %v261, %v262
    %v264 = vmul.f32 %v100, %v235
    %v265 = vadd.f32 %v263, %v264
    %v266 = vmul.f32 %v82, %v205
    %v267 = vadd.f32 %v266, 0.0
    %v268 = vmul.f32 %v91, %v223
    %v269 = vadd.f32 %v267, %v268
    %v270 = vmul.f32 %v100, %v241
    %v271 = vadd.f32 %v269, %v270
    %v272 = vmul.f32 %v85, %v205
    %v273 = vadd.f32 %v272, 0.0
    %v274 = vmul.f32 %v94, %v223
    %v275 = vadd.f32 %v273, %v274
    %v276 = vmul.f32 %v103, %v241
    %v277 = vadd.f32 %v275, %v276
    %v278 = vmul.f32 %v64, %v247
    %v279 = vmul.f32 %v67, %v265
    %v280 = vmul.f32 %v70, %v277
    %v281 = vmul.f32 %v128, %v135
    %v282 = vmul.f32 %v281, %v253
    %v283 = vmul.f32 %v128, %v142
    %v284 = vmul.f32 %v283, %v259
    %v285 = vmul.f32 %v135, %v142
    %v286 = vmul.f32 %v285, %v271
    %v287 = vadd.f32 %v278, %v279
    %v288 = vadd.f32 %v287, %v280
    %v289 = vmax.f32 %v288, 0.0
    %v290 = vmul.f32 %v278, %v279
    %v291 = vmul.f32 %v282, %v282
    %v292 = vsub.f32 %v290, %v291
    %v293 = vmul.f32 %v278, %v280
    %v294 = vadd.f32 %v292, %v293
    %v295 = vmul.f32 %v284, %v284
    %v296 = vsub.f32 %v294, %v295
    %v297 = vmul.f32 %v279, %v280
    %v298 = vadd.f32 %v296, %v297
    %v299 = vmul.f32 %v286, %v286
    %v300 = vsub.f32 %v298, %v299
    %v301 = vmax.f32 %v300, 0.0
    %v302 = vmul.f32 %v64, %v67
    %v303 = vmul.f32 %v302, %v70
    %v304 = vmul.f32 %v72, %v74
    %v305 = vmul.f32 %v304, %v76
    %v306 = vmul.f32 %v303, %v305
    %v307 = vrsqrt.pop %v306
    %v308 = vmul.f32 %v306, %v307
    %vm309 = vcmp.eq.f32.partialorder %v306, inf
    %v310 = vsel %vm309, %v306, %v308
    %vm311 = vcmp.eq.f32.partialorder %v306, 0.0
    %v312 = vand.u32 %v306, 2147483648
    %v313 = vsel %vm311, %v312, %v310
    %v314 = vmul.f32 %v313, 2.0
    %v315 = vadd.f32 %v64, %v67
    %v316 = vadd.f32 %v315, %v70
    %v317 = vadd.f32 %v72, %v74
    %v318 = vadd.f32 %v317, %v76
    %v319 = vadd.f32 %v316, %v318
    %s320 = scalar_lea.vmem [#allocation2], %s40
    %v321 = vld [vmem:[%s320] sm:$0xff]
    %s322 = scalar_lea.vmem [#allocation5], %s40
    %v323 = vld [vmem:[%s322] sm:$0xff]
    %v324 = vsub.f32 %v321, %v323
    %v325 = vmul.f32 %v324, %v324
    %v326 = vadd.f32 %v325, 0.0
    %s327 = sadd.s32 %s40, 16
    %s328 = scalar_lea.vmem [#allocation2], %s327
    %v329 = vld [vmem:[%s328] sm:$0xff]
    %s330 = scalar_lea.vmem [#allocation5], %s327
    %v331 = vld [vmem:[%s330] sm:$0xff]
    %v332 = vsub.f32 %v329, %v331
    %v333 = vmul.f32 %v332, %v332
    %v334 = vadd.f32 %v326, %v333
    %s335 = sadd.s32 %s40, 32
    %s336 = scalar_lea.vmem [#allocation2], %s335
    %v337 = vld [vmem:[%s336] sm:$0xff]
    %s338 = scalar_lea.vmem [#allocation5], %s335
    %v339 = vld [vmem:[%s338] sm:$0xff]
    %v340 = vsub.f32 %v337, %v339
    %v341 = vmul.f32 %v340, %v340
    %v342 = vadd.f32 %v334, %v341
    %s343 = sadd.s32 %s40, 48
    %s344 = scalar_lea.vmem [#allocation2], %s343
    %v345 = vld [vmem:[%s344] sm:$0xff]
    %s346 = sadd.s32 %s40, 64
    %s347 = scalar_lea.vmem [#allocation2], %s346
    %v348 = vld [vmem:[%s347] sm:$0xff]
    %s349 = sadd.s32 %s40, 80
    %s350 = scalar_lea.vmem [#allocation2], %s349
    %v351 = vld [vmem:[%s350] sm:$0xff]
    %s352 = scalar_lea.vmem [#allocation5], %s343
    %v353 = vld [vmem:[%s352] sm:$0xff]
    %s354 = scalar_lea.vmem [#allocation5], %s346
    %v355 = vld [vmem:[%s354] sm:$0xff]
    %s356 = scalar_lea.vmem [#allocation5], %s349
    %v357 = vld [vmem:[%s356] sm:$0xff]
    %s358 = sadd.s32 %s40, 96
    %s359 = scalar_lea.vmem [#allocation2], %s358
    %v360 = vld [vmem:[%s359] sm:$0xff]
    %s361 = sadd.s32 %s40, 112
    %s362 = scalar_lea.vmem [#allocation2], %s361
    %v363 = vld [vmem:[%s362] sm:$0xff]
    %s364 = sadd.s32 %s40, 128
    %s365 = scalar_lea.vmem [#allocation2], %s364
    %v366 = vld [vmem:[%s365] sm:$0xff]
    %s367 = sadd.s32 %s40, 144
    %s368 = scalar_lea.vmem [#allocation2], %s367
    %v369 = vld [vmem:[%s368] sm:$0xff]
    %s370 = sadd.s32 %s40, 160
    %s371 = scalar_lea.vmem [#allocation2], %s370
    %v372 = vld [vmem:[%s371] sm:$0xff]
    %s373 = sadd.s32 %s40, 176
    %s374 = scalar_lea.vmem [#allocation2], %s373
    %v375 = vld [vmem:[%s374] sm:$0xff]
    %s376 = sadd.s32 %s40, 192
    %s377 = scalar_lea.vmem [#allocation2], %s376
    %v378 = vld [vmem:[%s377] sm:$0xff]
    %s379 = sadd.s32 %s40, 208
    %s380 = scalar_lea.vmem [#allocation2], %s379
    %v381 = vld [vmem:[%s380] sm:$0xff]
    %s382 = sadd.s32 %s40, 224
    %s383 = scalar_lea.vmem [#allocation2], %s382
    %v384 = vld [vmem:[%s383] sm:$0xff]
    %s385 = scalar_lea.vmem [#allocation5], %s358
    %v386 = vld [vmem:[%s385] sm:$0xff]
    %s387 = scalar_lea.vmem [#allocation5], %s361
    %v388 = vld [vmem:[%s387] sm:$0xff]
    %s389 = scalar_lea.vmem [#allocation5], %s364
    %v390 = vld [vmem:[%s389] sm:$0xff]
    %s391 = scalar_lea.vmem [#allocation5], %s367
    %v392 = vld [vmem:[%s391] sm:$0xff]
    %s393 = scalar_lea.vmem [#allocation5], %s370
    %v394 = vld [vmem:[%s393] sm:$0xff]
    %s395 = scalar_lea.vmem [#allocation5], %s373
    %v396 = vld [vmem:[%s395] sm:$0xff]
    %s397 = scalar_lea.vmem [#allocation5], %s376
    %v398 = vld [vmem:[%s397] sm:$0xff]
    %s399 = scalar_lea.vmem [#allocation5], %s379
    %v400 = vld [vmem:[%s399] sm:$0xff]
    %s401 = scalar_lea.vmem [#allocation5], %s382
    %v402 = vld [vmem:[%s401] sm:$0xff]
    %v403 = vrsqrt.pop %v345
    %v404 = vmul.f32 %v345, %v403
    %vm405 = vcmp.eq.f32.partialorder %v345, inf
    %v406 = vsel %vm405, %v345, %v404
    %vm407 = vcmp.eq.f32.partialorder %v345, 0.0
    %v408 = vand.u32 %v345, 2147483648
    %v409 = vsel %vm407, %v408, %v406
    %v410 = vrsqrt.pop %v348
    %v411 = vmul.f32 %v348, %v410
    %vm412 = vcmp.eq.f32.partialorder %v348, inf
    %v413 = vsel %vm412, %v348, %v411
    %vm414 = vcmp.eq.f32.partialorder %v348, 0.0
    %v415 = vand.u32 %v348, 2147483648
    %v416 = vsel %vm414, %v415, %v413
    %v417 = vrsqrt.pop %v351
    %v418 = vmul.f32 %v351, %v417
    %vm419 = vcmp.eq.f32.partialorder %v351, inf
    %v420 = vsel %vm419, %v351, %v418
    %vm421 = vcmp.eq.f32.partialorder %v351, 0.0
    %v422 = vand.u32 %v351, 2147483648
    %v423 = vsel %vm421, %v422, %v420
    %v424 = vmul.f32 %v386, %v353
    %v425 = vmul.f32 %v424, %v386
    %v426 = vadd.f32 %v425, 0.0
    %v427 = vmul.f32 %v388, %v355
    %v428 = vmul.f32 %v427, %v388
    %v429 = vadd.f32 %v426, %v428
    %v430 = vmul.f32 %v390, %v357
    %v431 = vmul.f32 %v430, %v390
    %v432 = vadd.f32 %v429, %v431
    %v433 = vmul.f32 %v424, %v392
    %v434 = vadd.f32 %v433, 0.0
    %v435 = vmul.f32 %v427, %v394
    %v436 = vadd.f32 %v434, %v435
    %v437 = vmul.f32 %v430, %v396
    %v438 = vadd.f32 %v436, %v437
    %v439 = vmul.f32 %v424, %v398
    %v440 = vadd.f32 %v439, 0.0
    %v441 = vmul.f32 %v427, %v400
    %v442 = vadd.f32 %v440, %v441
    %v443 = vmul.f32 %v430, %v402
    %v444 = vadd.f32 %v442, %v443
    %v445 = vmul.f32 %v392, %v353
    %v446 = vmul.f32 %v445, %v392
    %v447 = vadd.f32 %v446, 0.0
    %v448 = vmul.f32 %v394, %v355
    %v449 = vmul.f32 %v448, %v394
    %v450 = vadd.f32 %v447, %v449
    %v451 = vmul.f32 %v396, %v357
    %v452 = vmul.f32 %v451, %v396
    %v453 = vadd.f32 %v450, %v452
    %v454 = vmul.f32 %v445, %v398
    %v455 = vadd.f32 %v454, 0.0
    %v456 = vmul.f32 %v448, %v400
    %v457 = vadd.f32 %v455, %v456
    %v458 = vmul.f32 %v451, %v402
    %v459 = vadd.f32 %v457, %v458
    %v460 = vmul.f32 %v398, %v353
    %v461 = vmul.f32 %v460, %v398
    %v462 = vadd.f32 %v461, 0.0
    %v463 = vmul.f32 %v400, %v355
    %v464 = vmul.f32 %v463, %v400
    %v465 = vadd.f32 %v462, %v464
    %v466 = vmul.f32 %v402, %v357
    %v467 = vmul.f32 %v466, %v402
    %v468 = vadd.f32 %v465, %v467
    %v469 = vmul.f32 %v432, %v360
    %v470 = vadd.f32 %v469, 0.0
    %v471 = vmul.f32 %v438, %v369
    %v472 = vadd.f32 %v470, %v471
    %v473 = vmul.f32 %v444, %v378
    %v474 = vadd.f32 %v472, %v473
    %v475 = vmul.f32 %v432, %v363
    %v476 = vadd.f32 %v475, 0.0
    %v477 = vmul.f32 %v438, %v372
    %v478 = vadd.f32 %v476, %v477
    %v479 = vmul.f32 %v444, %v381
    %v480 = vadd.f32 %v478, %v479
    %v481 = vmul.f32 %v432, %v366
    %v482 = vadd.f32 %v481, 0.0
    %v483 = vmul.f32 %v438, %v375
    %v484 = vadd.f32 %v482, %v483
    %v485 = vmul.f32 %v444, %v384
    %v486 = vadd.f32 %v484, %v485
    %v487 = vmul.f32 %v438, %v360
    %v488 = vadd.f32 %v487, 0.0
    %v489 = vmul.f32 %v453, %v369
    %v490 = vadd.f32 %v488, %v489
    %v491 = vmul.f32 %v459, %v378
    %v492 = vadd.f32 %v490, %v491
    %v493 = vmul.f32 %v438, %v363
    %v494 = vadd.f32 %v493, 0.0
    %v495 = vmul.f32 %v453, %v372
    %v496 = vadd.f32 %v494, %v495
    %v497 = vmul.f32 %v459, %v381
    %v498 = vadd.f32 %v496, %v497
    %v499 = vmul.f32 %v438, %v366
    %v500 = vadd.f32 %v499, 0.0
    %v501 = vmul.f32 %v453, %v375
    %v502 = vadd.f32 %v500, %v501
    %v503 = vmul.f32 %v459, %v384
    %v504 = vadd.f32 %v502, %v503
    %v505 = vmul.f32 %v444, %v360
    %v506 = vadd.f32 %v505, 0.0
    %v507 = vmul.f32 %v459, %v369
    %v508 = vadd.f32 %v506, %v507
    %v509 = vmul.f32 %v468, %v378
    %v510 = vadd.f32 %v508, %v509
    %v511 = vmul.f32 %v444, %v363
    %v512 = vadd.f32 %v511, 0.0
    %v513 = vmul.f32 %v459, %v372
    %v514 = vadd.f32 %v512, %v513
    %v515 = vmul.f32 %v468, %v381
    %v516 = vadd.f32 %v514, %v515
    %v517 = vmul.f32 %v444, %v366
    %v518 = vadd.f32 %v517, 0.0
    %v519 = vmul.f32 %v459, %v375
    %v520 = vadd.f32 %v518, %v519
    %v521 = vmul.f32 %v468, %v384
    %v522 = vadd.f32 %v520, %v521
    %v523 = vmul.f32 %v360, %v474
    %v524 = vadd.f32 %v523, 0.0
    %v525 = vmul.f32 %v369, %v492
    %v526 = vadd.f32 %v524, %v525
    %v527 = vmul.f32 %v378, %v510
    %v528 = vadd.f32 %v526, %v527
    %v529 = vmul.f32 %v360, %v480
    %v530 = vadd.f32 %v529, 0.0
    %v531 = vmul.f32 %v369, %v498
    %v532 = vadd.f32 %v530, %v531
    %v533 = vmul.f32 %v378, %v516
    %v534 = vadd.f32 %v532, %v533
    %v535 = vmul.f32 %v360, %v486
    %v536 = vadd.f32 %v535, 0.0
    %v537 = vmul.f32 %v369, %v504
    %v538 = vadd.f32 %v536, %v537
    %v539 = vmul.f32 %v378, %v522
    %v540 = vadd.f32 %v538, %v539
    %v541 = vmul.f32 %v363, %v480
    %v542 = vadd.f32 %v541, 0.0
    %v543 = vmul.f32 %v372, %v498
    %v544 = vadd.f32 %v542, %v543
    %v545 = vmul.f32 %v381, %v516
    %v546 = vadd.f32 %v544, %v545
    %v547 = vmul.f32 %v363, %v486
    %v548 = vadd.f32 %v547, 0.0
    %v549 = vmul.f32 %v372, %v504
    %v550 = vadd.f32 %v548, %v549
    %v551 = vmul.f32 %v381, %v522
    %v552 = vadd.f32 %v550, %v551
    %v553 = vmul.f32 %v366, %v486
    %v554 = vadd.f32 %v553, 0.0
    %v555 = vmul.f32 %v375, %v504
    %v556 = vadd.f32 %v554, %v555
    %v557 = vmul.f32 %v384, %v522
    %v558 = vadd.f32 %v556, %v557
    %v559 = vmul.f32 %v345, %v528
    %v560 = vmul.f32 %v348, %v546
    %v561 = vmul.f32 %v351, %v558
    %v562 = vmul.f32 %v409, %v416
    %v563 = vmul.f32 %v562, %v534
    %v564 = vmul.f32 %v409, %v423
    %v565 = vmul.f32 %v564, %v540
    %v566 = vmul.f32 %v416, %v423
    %v567 = vmul.f32 %v566, %v552
    %v568 = vadd.f32 %v559, %v560
    %v569 = vadd.f32 %v568, %v561
    %v570 = vmax.f32 %v569, 0.0
    %v571 = vmul.f32 %v559, %v560
    %v572 = vmul.f32 %v563, %v563
    %v573 = vsub.f32 %v571, %v572
    %v574 = vmul.f32 %v559, %v561
    %v575 = vadd.f32 %v573, %v574
    %v576 = vmul.f32 %v565, %v565
    %v577 = vsub.f32 %v575, %v576
    %v578 = vmul.f32 %v560, %v561
    %v579 = vadd.f32 %v577, %v578
    %v580 = vmul.f32 %v567, %v567
    %v581 = vsub.f32 %v579, %v580
    %v582 = vmax.f32 %v581, 0.0
    %v583 = vmul.f32 %v345, %v348
    %v584 = vmul.f32 %v583, %v351
    %v585 = vmul.f32 %v353, %v355
    %v586 = vmul.f32 %v585, %v357
    %v587 = vmul.f32 %v584, %v586
    %v588 = vrsqrt.pop %v587
    %v589 = vmul.f32 %v587, %v588
    %vm590 = vcmp.eq.f32.partialorder %v587, inf
    %v591 = vsel %vm590, %v587, %v589
    %vm592 = vcmp.eq.f32.partialorder %v587, 0.0
    %v593 = vand.u32 %v587, 2147483648
    %v594 = vsel %vm592, %v593, %v591
    %v595 = vmul.f32 %v594, 2.0
    %v596 = vadd.f32 %v345, %v348
    %v597 = vadd.f32 %v596, %v351
    %v598 = vadd.f32 %v353, %v355
    %v599 = vadd.f32 %v598, %v357
    %v600 = vadd.f32 %v597, %v599
    %v601 = vrsqrt.pop %v289
    %v602 = vmul.f32 %v289, %v601
    %vm603 = vcmp.eq.f32.partialorder %v289, inf
    %v604 = vsel %vm603, %v289, %v602
    %vm605 = vcmp.eq.f32.partialorder %v289, 0.0
    %v606 = vand.u32 %v289, 2147483648
    %v607 = vsel %vm605, %v606, %v604
    %v608 = vrsqrt.pop %v570
    %v609 = vmul.f32 %v570, %v608
    %vm610 = vcmp.eq.f32.partialorder %v570, inf
    %v611 = vsel %vm610, %v570, %v609
    %vm612 = vcmp.eq.f32.partialorder %v570, 0.0
    %v613 = vand.u32 %v570, 2147483648
    %v614 = vsel %vm612, %v613, %v611
    %v615 = vmul.f32 %v314, %v607
    %v616 = vadd.f32 %v301, %v615
    %v617 = vrsqrt.pop %v616
    %v618 = vmul.f32 %v616, %v617
    %vm619 = vcmp.eq.f32.partialorder %v616, inf
    %v620 = vsel %vm619, %v616, %v618
    %vm621 = vcmp.eq.f32.partialorder %v616, 0.0
    %v622 = vand.u32 %v616, 2147483648
    %v623 = vsel %vm621, %v622, %v620
    %v624 = vmul.f32 %v595, %v614
    %v625 = vadd.f32 %v582, %v624
    %v626 = vrsqrt.pop %v625
    %v627 = vmul.f32 %v625, %v626
    %vm628 = vcmp.eq.f32.partialorder %v625, inf
    %v629 = vsel %vm628, %v625, %v627
    %vm630 = vcmp.eq.f32.partialorder %v625, 0.0
    %v631 = vand.u32 %v625, 2147483648
    %v632 = vsel %vm630, %v631, %v629
    %v633 = vmul.f32 %v623, 2.0
    %v634 = vadd.f32 %v289, %v633
    %v635 = vrsqrt.pop %v634
    %v636 = vmul.f32 %v634, %v635
    %vm637 = vcmp.eq.f32.partialorder %v634, inf
    %v638 = vsel %vm637, %v634, %v636
    %vm639 = vcmp.eq.f32.partialorder %v634, 0.0
    %v640 = vand.u32 %v634, 2147483648
    %v641 = vsel %vm639, %v640, %v638
    %v642 = vmul.f32 %v632, 2.0
    %v643 = vadd.f32 %v570, %v642
    %v644 = vrsqrt.pop %v643
    %v645 = vmul.f32 %v643, %v644
    %vm646 = vcmp.eq.f32.partialorder %v643, inf
    %v647 = vsel %vm646, %v643, %v645
    %vm648 = vcmp.eq.f32.partialorder %v643, 0.0
    %v649 = vand.u32 %v643, 2147483648
    %v650 = vsel %vm648, %v649, %v647
    %v651 = vmul.f32 %v314, %v641
    %v652 = vadd.f32 %v301, %v651
    %v653 = vrsqrt.pop %v652
    %v654 = vmul.f32 %v652, %v653
    %vm655 = vcmp.eq.f32.partialorder %v652, inf
    %v656 = vsel %vm655, %v652, %v654
    %vm657 = vcmp.eq.f32.partialorder %v652, 0.0
    %v658 = vand.u32 %v652, 2147483648
    %v659 = vsel %vm657, %v658, %v656
    %v660 = vmul.f32 %v595, %v650
    %v661 = vadd.f32 %v582, %v660
    %v662 = vrsqrt.pop %v661
    %v663 = vmul.f32 %v661, %v662
    %vm664 = vcmp.eq.f32.partialorder %v661, inf
    %v665 = vsel %vm664, %v661, %v663
    %vm666 = vcmp.eq.f32.partialorder %v661, 0.0
    %v667 = vand.u32 %v661, 2147483648
    %v668 = vsel %vm666, %v667, %v665
    %v669 = vmul.f32 %v659, 2.0
    %v670 = vadd.f32 %v289, %v669
    %v671 = vrsqrt.pop %v670
    %v672 = vmul.f32 %v670, %v671
    %vm673 = vcmp.eq.f32.partialorder %v670, inf
    %v674 = vsel %vm673, %v670, %v672
    %vm675 = vcmp.eq.f32.partialorder %v670, 0.0
    %v676 = vand.u32 %v670, 2147483648
    %v677 = vsel %vm675, %v676, %v674
    %v678 = vmul.f32 %v668, 2.0
    %v679 = vadd.f32 %v570, %v678
    %v680 = vrsqrt.pop %v679
    %v681 = vmul.f32 %v679, %v680
    %vm682 = vcmp.eq.f32.partialorder %v679, inf
    %v683 = vsel %vm682, %v679, %v681
    %vm684 = vcmp.eq.f32.partialorder %v679, 0.0
    %v685 = vand.u32 %v679, 2147483648
    %v686 = vsel %vm684, %v685, %v683
    %v687 = vmul.f32 %v314, %v677
    %v688 = vadd.f32 %v301, %v687
    %v689 = vrsqrt.pop %v688
    %v690 = vmul.f32 %v688, %v689
    %vm691 = vcmp.eq.f32.partialorder %v688, inf
    %v692 = vsel %vm691, %v688, %v690
    %vm693 = vcmp.eq.f32.partialorder %v688, 0.0
    %v694 = vand.u32 %v688, 2147483648
    %v695 = vsel %vm693, %v694, %v692
    %v696 = vmul.f32 %v595, %v686
    %v697 = vadd.f32 %v582, %v696
    %v698 = vrsqrt.pop %v697
    %v699 = vmul.f32 %v697, %v698
    %vm700 = vcmp.eq.f32.partialorder %v697, inf
    %v701 = vsel %vm700, %v697, %v699
    %vm702 = vcmp.eq.f32.partialorder %v697, 0.0
    %v703 = vand.u32 %v697, 2147483648
    %v704 = vsel %vm702, %v703, %v701
    %v705 = vmul.f32 %v695, 2.0
    %v706 = vadd.f32 %v289, %v705
    %v707 = vrsqrt.pop %v706
    %v708 = vmul.f32 %v706, %v707
    %vm709 = vcmp.eq.f32.partialorder %v706, inf
    %v710 = vsel %vm709, %v706, %v708
    %vm711 = vcmp.eq.f32.partialorder %v706, 0.0
    %v712 = vand.u32 %v706, 2147483648
    %v713 = vsel %vm711, %v712, %v710
    %v714 = vmul.f32 %v704, 2.0
    %v715 = vadd.f32 %v570, %v714
    %v716 = vrsqrt.pop %v715
    %v717 = vmul.f32 %v715, %v716
    %vm718 = vcmp.eq.f32.partialorder %v715, inf
    %v719 = vsel %vm718, %v715, %v717
    %vm720 = vcmp.eq.f32.partialorder %v715, 0.0
    %v721 = vand.u32 %v715, 2147483648
    %v722 = vsel %vm720, %v721, %v719
    %v723 = vmul.f32 %v314, %v713
    %v724 = vadd.f32 %v301, %v723
    %v725 = vrsqrt.pop %v724
    %v726 = vmul.f32 %v724, %v725
    %vm727 = vcmp.eq.f32.partialorder %v724, inf
    %v728 = vsel %vm727, %v724, %v726
    %vm729 = vcmp.eq.f32.partialorder %v724, 0.0
    %v730 = vand.u32 %v724, 2147483648
    %v731 = vsel %vm729, %v730, %v728
    %v732 = vmul.f32 %v595, %v722
    %v733 = vadd.f32 %v582, %v732
    %v734 = vrsqrt.pop %v733
    %v735 = vmul.f32 %v733, %v734
    %vm736 = vcmp.eq.f32.partialorder %v733, inf
    %v737 = vsel %vm736, %v733, %v735
    %vm738 = vcmp.eq.f32.partialorder %v733, 0.0
    %v739 = vand.u32 %v733, 2147483648
    %v740 = vsel %vm738, %v739, %v737
    %v741 = vmul.f32 %v731, 2.0
    %v742 = vadd.f32 %v289, %v741
    %v743 = vrsqrt.pop %v742
    %v744 = vmul.f32 %v742, %v743
    %vm745 = vcmp.eq.f32.partialorder %v742, inf
    %v746 = vsel %vm745, %v742, %v744
    %vm747 = vcmp.eq.f32.partialorder %v742, 0.0
    %v748 = vand.u32 %v742, 2147483648
    %v749 = vsel %vm747, %v748, %v746
    %v750 = vmul.f32 %v740, 2.0
    %v751 = vadd.f32 %v570, %v750
    %v752 = vrsqrt.pop %v751
    %v753 = vmul.f32 %v751, %v752
    %vm754 = vcmp.eq.f32.partialorder %v751, inf
    %v755 = vsel %vm754, %v751, %v753
    %vm756 = vcmp.eq.f32.partialorder %v751, 0.0
    %v757 = vand.u32 %v751, 2147483648
    %v758 = vsel %vm756, %v757, %v755
    %v759 = vmul.f32 %v314, %v749
    %v760 = vadd.f32 %v301, %v759
    %v761 = vrsqrt.pop %v760
    %v762 = vmul.f32 %v760, %v761
    %vm763 = vcmp.eq.f32.partialorder %v760, inf
    %v764 = vsel %vm763, %v760, %v762
    %vm765 = vcmp.eq.f32.partialorder %v760, 0.0
    %v766 = vand.u32 %v760, 2147483648
    %v767 = vsel %vm765, %v766, %v764
    %v768 = vmul.f32 %v595, %v758
    %v769 = vadd.f32 %v582, %v768
    %v770 = vrsqrt.pop %v769
    %v771 = vmul.f32 %v769, %v770
    %vm772 = vcmp.eq.f32.partialorder %v769, inf
    %v773 = vsel %vm772, %v769, %v771
    %vm774 = vcmp.eq.f32.partialorder %v769, 0.0
    %v775 = vand.u32 %v769, 2147483648
    %v776 = vsel %vm774, %v775, %v773
    %v777 = vmul.f32 %v767, 2.0
    %v778 = vadd.f32 %v289, %v777
    %v779 = vrsqrt.pop %v778
    %v780 = vmul.f32 %v778, %v779
    %vm781 = vcmp.eq.f32.partialorder %v778, inf
    %v782 = vsel %vm781, %v778, %v780
    %vm783 = vcmp.eq.f32.partialorder %v778, 0.0
    %v784 = vand.u32 %v778, 2147483648
    %v785 = vsel %vm783, %v784, %v782
    %v786 = vmul.f32 %v776, 2.0
    %v787 = vadd.f32 %v570, %v786
    %v788 = vrsqrt.pop %v787
    %v789 = vmul.f32 %v787, %v788
    %vm790 = vcmp.eq.f32.partialorder %v787, inf
    %v791 = vsel %vm790, %v787, %v789
    %vm792 = vcmp.eq.f32.partialorder %v787, 0.0
    %v793 = vand.u32 %v787, 2147483648
    %v794 = vsel %vm792, %v793, %v791
    %v795 = vmul.f32 %v314, %v785
    %v796 = vadd.f32 %v301, %v795
    %v797 = vrsqrt.pop %v796
    %v798 = vmul.f32 %v796, %v797
    %vm799 = vcmp.eq.f32.partialorder %v796, inf
    %v800 = vsel %vm799, %v796, %v798
    %vm801 = vcmp.eq.f32.partialorder %v796, 0.0
    %v802 = vand.u32 %v796, 2147483648
    %v803 = vsel %vm801, %v802, %v800
    %v804 = vmul.f32 %v595, %v794
    %v805 = vadd.f32 %v582, %v804
    %v806 = vrsqrt.pop %v805
    %v807 = vmul.f32 %v805, %v806
    %vm808 = vcmp.eq.f32.partialorder %v805, inf
    %v809 = vsel %vm808, %v805, %v807
    %vm810 = vcmp.eq.f32.partialorder %v805, 0.0
    %v811 = vand.u32 %v805, 2147483648
    %v812 = vsel %vm810, %v811, %v809
    %v813 = vmul.f32 %v803, 2.0
    %v814 = vadd.f32 %v289, %v813
    %v815 = vrsqrt.pop %v814
    %v816 = vmul.f32 %v814, %v815
    %vm817 = vcmp.eq.f32.partialorder %v814, inf
    %v818 = vsel %vm817, %v814, %v816
    %vm819 = vcmp.eq.f32.partialorder %v814, 0.0
    %v820 = vand.u32 %v814, 2147483648
    %v821 = vsel %vm819, %v820, %v818
    %v822 = vmul.f32 %v812, 2.0
    %v823 = vadd.f32 %v570, %v822
    %v824 = vrsqrt.pop %v823
    %v825 = vmul.f32 %v823, %v824
    %vm826 = vcmp.eq.f32.partialorder %v823, inf
    %v827 = vsel %vm826, %v823, %v825
    %vm828 = vcmp.eq.f32.partialorder %v823, 0.0
    %v829 = vand.u32 %v823, 2147483648
    %v830 = vsel %vm828, %v829, %v827
    %v831 = vmul.f32 %v314, %v821
    %v832 = vadd.f32 %v301, %v831
    %v833 = vrsqrt.pop %v832
    %v834 = vmul.f32 %v832, %v833
    %vm835 = vcmp.eq.f32.partialorder %v832, inf
    %v836 = vsel %vm835, %v832, %v834
    %vm837 = vcmp.eq.f32.partialorder %v832, 0.0
    %v838 = vand.u32 %v832, 2147483648
    %v839 = vsel %vm837, %v838, %v836
    %v840 = vmul.f32 %v595, %v830
    %v841 = vadd.f32 %v582, %v840
    %v842 = vrsqrt.pop %v841
    %v843 = vmul.f32 %v841, %v842
    %vm844 = vcmp.eq.f32.partialorder %v841, inf
    %v845 = vsel %vm844, %v841, %v843
    %vm846 = vcmp.eq.f32.partialorder %v841, 0.0
    %v847 = vand.u32 %v841, 2147483648
    %v848 = vsel %vm846, %v847, %v845
    %v849 = vmul.f32 %v839, 2.0
    %v850 = vadd.f32 %v289, %v849
    %v851 = vrsqrt.pop %v850
    %v852 = vmul.f32 %v850, %v851
    %vm853 = vcmp.eq.f32.partialorder %v850, inf
    %v854 = vsel %vm853, %v850, %v852
    %vm855 = vcmp.eq.f32.partialorder %v850, 0.0
    %v856 = vand.u32 %v850, 2147483648
    %v857 = vsel %vm855, %v856, %v854
    %v858 = vmul.f32 %v848, 2.0
    %v859 = vadd.f32 %v570, %v858
    %v860 = vrsqrt.pop %v859
    %v861 = vmul.f32 %v859, %v860
    %vm862 = vcmp.eq.f32.partialorder %v859, inf
    %v863 = vsel %vm862, %v859, %v861
    %vm864 = vcmp.eq.f32.partialorder %v859, 0.0
    %v865 = vand.u32 %v859, 2147483648
    %v866 = vsel %vm864, %v865, %v863
    %v867 = vmul.f32 %v314, %v857
    %v868 = vadd.f32 %v301, %v867
    %v869 = vrsqrt.pop %v868
    %v870 = vmul.f32 %v868, %v869
    %vm871 = vcmp.eq.f32.partialorder %v868, inf
    %v872 = vsel %vm871, %v868, %v870
    %vm873 = vcmp.eq.f32.partialorder %v868, 0.0
    %v874 = vand.u32 %v868, 2147483648
    %v875 = vsel %vm873, %v874, %v872
    %v876 = vmul.f32 %v595, %v866
    %v877 = vadd.f32 %v582, %v876
    %v878 = vrsqrt.pop %v877
    %v879 = vmul.f32 %v877, %v878
    %vm880 = vcmp.eq.f32.partialorder %v877, inf
    %v881 = vsel %vm880, %v877, %v879
    %vm882 = vcmp.eq.f32.partialorder %v877, 0.0
    %v883 = vand.u32 %v877, 2147483648
    %v884 = vsel %vm882, %v883, %v881
    %v885 = vmul.f32 %v875, 2.0
    %v886 = vadd.f32 %v289, %v885
    %v887 = vrsqrt.pop %v886
    %v888 = vmul.f32 %v886, %v887
    %vm889 = vcmp.eq.f32.partialorder %v886, inf
    %v890 = vsel %vm889, %v886, %v888
    %vm891 = vcmp.eq.f32.partialorder %v886, 0.0
    %v892 = vand.u32 %v886, 2147483648
    %v893 = vsel %vm891, %v892, %v890
    %v894 = vmul.f32 %v884, 2.0
    %v895 = vadd.f32 %v570, %v894
    %v896 = vrsqrt.pop %v895
    %v897 = vmul.f32 %v895, %v896
    %vm898 = vcmp.eq.f32.partialorder %v895, inf
    %v899 = vsel %vm898, %v895, %v897
    %vm900 = vcmp.eq.f32.partialorder %v895, 0.0
    %v901 = vand.u32 %v895, 2147483648
    %v902 = vsel %vm900, %v901, %v899
    %v903 = vmul.f32 %v893, 2.0
    %v904 = vsub.f32 %v319, %v903
    %v905 = vmax.f32 %v904, 0.0
    %v906 = vadd.f32 %v61, %v905
    %v907 = vrsqrt.pop %v906
    %v908 = vmul.f32 %v906, %v907
    %vm909 = vcmp.eq.f32.partialorder %v906, inf
    %v910 = vsel %vm909, %v906, %v908
    %vm911 = vcmp.eq.f32.partialorder %v906, 0.0
    %v912 = vand.u32 %v906, 2147483648
    %v913 = vsel %vm911, %v912, %v910
    %914 = vst [vmem:[#allocation7] sm:$0xff] %v913
    %v915 = vmul.f32 %v902, 2.0
    %v916 = vsub.f32 %v600, %v915
    %v917 = vmax.f32 %v916, 0.0
    %v918 = vadd.f32 %v342, %v917
    %v919 = vrsqrt.pop %v918
    %v920 = vmul.f32 %v918, %v919
    %vm921 = vcmp.eq.f32.partialorder %v918, inf
    %v922 = vsel %vm921, %v918, %v920
    %vm923 = vcmp.eq.f32.partialorder %v918, 0.0
    %v924 = vand.u32 %v918, 2147483648
    %v925 = vsel %vm923, %v924, %v922
    %s926 = scalar_lea.vmem [#allocation7], %s40
    %927 = vst [vmem:[%s926] sm:$0xff] %v925
    // Predicated region
    $region18: #{tpu_custom_call.1} parent=1 // pred_check
      _
    $region19: #{tpu_custom_call.1} parent=1 // pred_check_branch
      %929 = sbr.rel (0) target = $region21
    $region20: #{tpu_custom_call.1} parent=1 // pred_region
      %s931 = ssub.s32 256, 256
      %932 = vsyncadd [#allocation4], %s931
      %s933 = sshll.u32 [#allocation7], 4
      %s934 = int_to_ptr.vmem [resolvable:$true] %s933
      %939 = dma.vmem_to_hbm [thread:$0]  %s934, 256, %s2, [#allocation4], 128, 128, 8
    $region21: #{tpu_custom_call.1} parent=1 // pred_fallthru
      _
    // Predicated region
    $region22: #{tpu_custom_call.1} parent=1 // pred_check
      _
    $region23: #{tpu_custom_call.1} parent=1 // pred_check_branch
      %941 = sbr.rel (0) target = $region25
    $region24: #{tpu_custom_call.1} parent=1 // pred_region
      %942 = dma.done [#allocation4], 256
    $region25: #{tpu_custom_call.1} parent=1 // pred_fallthru
      _
    %943 = vsyncpa [#allocation3], 1
    %944 = vsyncpa [#allocation6], 1
    %945 = vsyncpa [#allocation4], 1

</llo_original>
